<compile_context>
chip_gen: v7x
topology: tpu7x:2x2x1
jax: 0.10.0
libtpu: 0.0.40
codegen_flags: <defaults>
</compile_context>

<pallas_src>
import functools
import math

import jax
import jax.numpy as jnp
from jax.experimental import pallas as pl
from jax.experimental.pallas import tpu as pltpu


def _mha_kernel(x_ref, w_ref, o_ref, *, num_heads, d_per_head, seq_len,
                batch_per_block):
    H, D, T, BB = num_heads, d_per_head, seq_len, batch_per_block
    d_model = H * D

    # One wide bf16 MXU matmul produces Q, K, V for every head & batch row.
    x = x_ref[...].astype(jnp.bfloat16)          # (BB*T, d_model)
    w = w_ref[...]                               # (d_model, 3*d_model) bf16
    qkv = jnp.dot(x, w, preferred_element_type=jnp.float32)   # (BB*T, 3*d_model) f32

    # Single leading-dim split (sublane-aligned: T % 8 == 0) so the attention
    # matmuls can be batched over the batch rows with leading-batch einsums.
    qkv = qkv.reshape(BB, T, 3 * d_model)

    # Additive causal bias, computed once, broadcast over batch and heads.
    row = jax.lax.broadcasted_iota(jnp.int32, (T, T), 0)
    col = jax.lax.broadcasted_iota(jnp.int32, (T, T), 1)
    bias = jnp.where(row >= col, 0.0, -1e30).astype(jnp.float32)   # (T, T)

    outs = []
    for h in range(H):                           # tiny static unroll
        lo = h * D
        q_h = qkv[:, :, 0 * d_model + lo: 0 * d_model + lo + D].astype(jnp.bfloat16)
        k_h = qkv[:, :, 1 * d_model + lo: 1 * d_model + lo + D].astype(jnp.bfloat16)
        v_h = qkv[:, :, 2 * d_model + lo: 2 * d_model + lo + D].astype(jnp.bfloat16)
        # v_h already carries the folded 1/sqrt(d_k) post-softmax scale.

        s = jnp.einsum('btd,bsd->bts', q_h, k_h,
                       preferred_element_type=jnp.float32)       # (BB, T, T) f32
        s = s + bias[None]

        # Softmax kept in f32; EUP reciprocal for the denominator.
        m = jnp.max(s, axis=-1, keepdims=True)
        e = jnp.exp(s - m)
        denom = jnp.sum(e, axis=-1, keepdims=True)
        p = e * pl.reciprocal(denom, approx=True)
        # TODO(synk): training-mode dropout on p not implemented.

        outs.append(jnp.einsum('bts,bsd->btd', p.astype(jnp.bfloat16), v_h,
                               preferred_element_type=jnp.float32))   # (BB, T, D)

    # Concatenate heads along lanes -> one lane-dense (BB, T, H*D) store.
    o_ref[...] = jnp.concatenate(outs, axis=-1).astype(o_ref.dtype)


def multi_head_attention(x, wq, wk, wv, block_size, batch_blocks=None):
    """x: (B, T, d_in); wq/wk/wv: (H, d_per_head, d_per_head) PyTorch (out,in) layout."""
    B, T, d_in = x.shape
    H, D, _ = wq.shape
    assert d_in == H * D
    assert T <= block_size
    assert T % 8 == 0
    d_model = H * D

    # One-time wrapper layout work: block-diagonal, pre-transposed, bf16 weights
    # so the kernel does a single x @ W_qkv.  1/sqrt(d_k) folded into V block.
    def _block_diag_t(w, scale=1.0):
        out = jnp.zeros((d_model, d_model), dtype=jnp.float32)
        for h in range(H):
            out = out.at[h * D:(h + 1) * D, h * D:(h + 1) * D].set(
                w[h].T.astype(jnp.float32) * scale)
        return out

    w_qkv = jnp.concatenate(
        [_block_diag_t(wq),
         _block_diag_t(wk),
         _block_diag_t(wv, scale=1.0 / math.sqrt(D))],
        axis=1).astype(jnp.bfloat16)                     # (d_model, 3*d_model)

    # Grid: one step on single-TC chips (v5e/v6e); explicit 2-way "parallel"
    # batch split for v7x's two TensorCores once the per-core work is nontrivial.
    if batch_blocks is None:
        batch_blocks = 2 if (B >= 2 and B % 2 == 0 and T >= 128) else 1
    assert B % batch_blocks == 0
    BB = B // batch_blocks

    kernel = functools.partial(_mha_kernel, num_heads=H, d_per_head=D,
                               seq_len=T, batch_per_block=BB)

    x_flat = x.reshape(B * T, d_model)    # lane-dense flattened activations (no-op copy)

    return pl.pallas_call(
        kernel,
        out_shape=jax.ShapeDtypeStruct((B, T, d_model), x.dtype),
        grid_spec=pltpu.PrefetchScalarGridSpec(
            num_scalar_prefetch=0,
            grid=(batch_blocks,),
            in_specs=[
                pl.BlockSpec((BB * T, d_model), lambda g: (g, 0)),
                # Full-extent, constant-index weight block: stays VMEM-resident.
                pl.BlockSpec((d_model, 3 * d_model), lambda g: (0, 0)),
            ],
            out_specs=pl.BlockSpec((BB, T, d_model), lambda g: (g, 0, 0)),
        ),
        compiler_params=pltpu.CompilerParams(
            dimension_semantics=("parallel",)),
    )(x_flat, w_qkv)


def _reference(x, wq, wk, wv, block_size):
    """Plain-JAX f32 replica of the PyTorch forward (inference mode)."""
    B, T, d_in = x.shape
    H, D, _ = wq.shape
    mask = jnp.tril(jnp.ones((block_size, block_size)))[:T, :T]
    outs = []
    for h in range(H):
        xh = x[:, :, h * D:(h + 1) * D]
        q = xh @ wq[h].T
        k = xh @ wk[h].T
        v = xh @ wv[h].T
        s = jnp.einsum("btd,bsd->bts", q, k)
        s = jnp.where(mask == 0, -jnp.inf, s)
        p = jax.nn.softmax(s, axis=-1)
        outs.append(jnp.einsum("bts,bsd->btd", p, v) / math.sqrt(D))
    return jnp.concatenate(outs, axis=2)


if __name__ == "__main__":
    # small, deterministic config
    num_heads = 4
    d_per_head = 32
    block_size = 16
    B, T = 2, 16
    d_in = num_heads * d_per_head

    key = jax.random.PRNGKey(0)
    kx, kq, kk, kv = jax.random.split(key, 4)
    x = jax.random.normal(kx, (B, T, d_in), dtype=jnp.float32)
    scale = 1.0 / math.sqrt(d_per_head)
    wq = jax.random.uniform(kq, (num_heads, d_per_head, d_per_head),
                            minval=-scale, maxval=scale, dtype=jnp.float32)
    wk = jax.random.uniform(kk, (num_heads, d_per_head, d_per_head),
                            minval=-scale, maxval=scale, dtype=jnp.float32)
    wv = jax.random.uniform(kv, (num_heads, d_per_head, d_per_head),
                            minval=-scale, maxval=scale, dtype=jnp.float32)

    out = multi_head_attention(x, wq, wk, wv, block_size)
    out = jax.block_until_ready(out)

    ref = _reference(x, wq, wk, wv, block_size)
    assert out.shape == (B, T, d_in)
    # bf16 MXU operands (f32 accumulation) + approx reciprocal: ~1e-2 relative
    # error expected; tolerance still catches any real masking/layout bug.
    assert jnp.allclose(out, ref, atol=3e-2, rtol=3e-2), float(jnp.max(jnp.abs(out - ref)))

    print("KERNEL_OK")
</pallas_src>

<mosaic_0001>
module attributes {stable_mosaic.version = 11 : i64} {
  func.func @_mha_kernel(%arg0: i32, %arg1: memref<32x128xf32, #tpu.memory_space<vmem>>, %arg2: memref<128x384xbf16, #tpu.memory_space<vmem>>, %arg3: memref<2x16x128xf32, #tpu.memory_space<vmem>>) attributes {dimension_semantics = [#tpu.dimension_semantics<parallel>], iteration_bounds = array<i64: 1>, scalar_prefetch = 0 : i64, scratch_operands = 0 : i64, tpu.core_type = #tpu.core_type<tc>, window_params = [{transform_indices = @transform_0, window_bounds = array<i64: 32, 128>}, {pipeline_mode = #tpu.pipeline_mode<synchronous>, transform_indices = @transform_1, window_bounds = array<i64: 128, 384>}, {transform_indices = @transform_2, window_bounds = array<i64: 2, 16, 128>}]} {
    %c0 = arith.constant 0 : index
    %c0_0 = arith.constant 0 : index
    %0 = vector.load %arg1[%c0, %c0_0] : memref<32x128xf32, #tpu.memory_space<vmem>>, vector<32x128xf32>
    %1 = arith.truncf %0 : vector<32x128xf32> to vector<32x128xbf16>
    %c0_1 = arith.constant 0 : index
    %c0_2 = arith.constant 0 : index
    %2 = vector.load %arg2[%c0_1, %c0_2] : memref<128x384xbf16, #tpu.memory_space<vmem>>, vector<128x384xbf16>
    %cst = arith.constant dense<0.000000e+00> : vector<32x384xf32>
    %3 = tpu.matmul %1, %2, %cst {dimension_numbers = #tpu.dot_dimension_numbers<[1], [0], [0], [1], [0, 0, 1, 1], [], []>} : vector<32x128xbf16>, vector<128x384xbf16>, vector<32x384xf32> -> vector<32x384xf32>
    %4 = vector.shape_cast %3 : vector<32x384xf32> to vector<2x16x384xf32>
    %5 = tpu.iota {dimensions = array<i32: 0>} : vector<16x16xi32>
    %6 = tpu.iota {dimensions = array<i32: 1>} : vector<16x16xi32>
    %7 = arith.cmpi sge, %5, %6 : vector<16x16xi32>
    %cst_3 = arith.constant 0.000000e+00 : f32
    %cst_4 = arith.constant -1.000000e+30 : f32
    %8 = vector.broadcast %cst_3 : f32 to vector<16x16xf32>
    %9 = vector.broadcast %cst_4 : f32 to vector<16x16xf32>
    %10 = arith.select %7, %8, %9 : vector<16x16xi1>, vector<16x16xf32>
    %11 = vector.extract_strided_slice %4 {offsets = [0, 0, 0], sizes = [2, 16, 32], strides = [1, 1, 1]} : vector<2x16x384xf32> to vector<2x16x32xf32>
    %12 = arith.truncf %11 : vector<2x16x32xf32> to vector<2x16x32xbf16>
    %13 = vector.extract_strided_slice %4 {offsets = [0, 0, 128], sizes = [2, 16, 32], strides = [1, 1, 1]} : vector<2x16x384xf32> to vector<2x16x32xf32>
    %14 = arith.truncf %13 : vector<2x16x32xf32> to vector<2x16x32xbf16>
    %15 = vector.extract_strided_slice %4 {offsets = [0, 0, 256], sizes = [2, 16, 32], strides = [1, 1, 1]} : vector<2x16x384xf32> to vector<2x16x32xf32>
    %16 = arith.truncf %15 : vector<2x16x32xf32> to vector<2x16x32xbf16>
    "tpu.trace_start"() <{level = 10 : i32, message = "btd,bsd->bts"}> : () -> ()
    %cst_5 = arith.constant dense<0.000000e+00> : vector<2x16x16xf32>
    %17 = tpu.matmul %12, %14, %cst_5 {dimension_numbers = #tpu.dot_dimension_numbers<[2], [2], [1], [1], [0, 0, 0, 1, 1, 1], [0], [0]>} : vector<2x16x32xbf16>, vector<2x16x32xbf16>, vector<2x16x16xf32> -> vector<2x16x16xf32>
    "tpu.trace_stop"() : () -> ()
    %18 = vector.shape_cast %10 : vector<16x16xf32> to vector<1x16x16xf32>
    %19 = vector.broadcast %18 : vector<1x16x16xf32> to vector<2x16x16xf32>
    %20 = arith.addf %17, %19 : vector<2x16x16xf32>
    %cst_6 = arith.constant dense<0xFF800000> : vector<2x16xf32>
    %21 = vector.multi_reduction <maximumf>, %20, %cst_6 [2] : vector<2x16x16xf32> to vector<2x16xf32>
    %22 = vector.shape_cast %21 : vector<2x16xf32> to vector<2x16x1xf32>
    %23 = vector.broadcast %22 : vector<2x16x1xf32> to vector<2x16x16xf32>
    %24 = arith.subf %20, %23 : vector<2x16x16xf32>
    %25 = math.exp %24 : vector<2x16x16xf32>
    %cst_7 = arith.constant dense<0.000000e+00> : vector<2x16xf32>
    %26 = vector.multi_reduction <add>, %25, %cst_7 [2] : vector<2x16x16xf32> to vector<2x16xf32>
    %27 = vector.shape_cast %26 : vector<2x16xf32> to vector<2x16x1xf32>
    %28 = tpu.reciprocal %27 {approx = true} : vector<2x16x1xf32> -> vector<2x16x1xf32>
    %29 = vector.broadcast %28 : vector<2x16x1xf32> to vector<2x16x16xf32>
    %30 = arith.mulf %25, %29 : vector<2x16x16xf32>
    %31 = arith.truncf %30 : vector<2x16x16xf32> to vector<2x16x16xbf16>
    "tpu.trace_start"() <{level = 10 : i32, message = "bts,bsd->btd"}> : () -> ()
    %cst_8 = arith.constant dense<0.000000e+00> : vector<2x16x32xf32>
    %32 = tpu.matmul %31, %16, %cst_8 {dimension_numbers = #tpu.dot_dimension_numbers<[2], [1], [1], [2], [0, 0, 0, 1, 1, 2], [0], [0]>} : vector<2x16x16xbf16>, vector<2x16x32xbf16>, vector<2x16x32xf32> -> vector<2x16x32xf32>
    "tpu.trace_stop"() : () -> ()
    %33 = vector.extract_strided_slice %4 {offsets = [0, 0, 32], sizes = [2, 16, 32], strides = [1, 1, 1]} : vector<2x16x384xf32> to vector<2x16x32xf32>
    %34 = arith.truncf %33 : vector<2x16x32xf32> to vector<2x16x32xbf16>
    %35 = vector.extract_strided_slice %4 {offsets = [0, 0, 160], sizes = [2, 16, 32], strides = [1, 1, 1]} : vector<2x16x384xf32> to vector<2x16x32xf32>
    %36 = arith.truncf %35 : vector<2x16x32xf32> to vector<2x16x32xbf16>
    %37 = vector.extract_strided_slice %4 {offsets = [0, 0, 288], sizes = [2, 16, 32], strides = [1, 1, 1]} : vector<2x16x384xf32> to vector<2x16x32xf32>
    %38 = arith.truncf %37 : vector<2x16x32xf32> to vector<2x16x32xbf16>
    "tpu.trace_start"() <{level = 10 : i32, message = "btd,bsd->bts"}> : () -> ()
    %cst_9 = arith.constant dense<0.000000e+00> : vector<2x16x16xf32>
    %39 = tpu.matmul %34, %36, %cst_9 {dimension_numbers = #tpu.dot_dimension_numbers<[2], [2], [1], [1], [0, 0, 0, 1, 1, 1], [0], [0]>} : vector<2x16x32xbf16>, vector<2x16x32xbf16>, vector<2x16x16xf32> -> vector<2x16x16xf32>
    "tpu.trace_stop"() : () -> ()
    %40 = vector.shape_cast %10 : vector<16x16xf32> to vector<1x16x16xf32>
    %41 = vector.broadcast %40 : vector<1x16x16xf32> to vector<2x16x16xf32>
    %42 = arith.addf %39, %41 : vector<2x16x16xf32>
    %cst_10 = arith.constant dense<0xFF800000> : vector<2x16xf32>
    %43 = vector.multi_reduction <maximumf>, %42, %cst_10 [2] : vector<2x16x16xf32> to vector<2x16xf32>
    %44 = vector.shape_cast %43 : vector<2x16xf32> to vector<2x16x1xf32>
    %45 = vector.broadcast %44 : vector<2x16x1xf32> to vector<2x16x16xf32>
    %46 = arith.subf %42, %45 : vector<2x16x16xf32>
    %47 = math.exp %46 : vector<2x16x16xf32>
    %cst_11 = arith.constant dense<0.000000e+00> : vector<2x16xf32>
    %48 = vector.multi_reduction <add>, %47, %cst_11 [2] : vector<2x16x16xf32> to vector<2x16xf32>
    %49 = vector.shape_cast %48 : vector<2x16xf32> to vector<2x16x1xf32>
    %50 = tpu.reciprocal %49 {approx = true} : vector<2x16x1xf32> -> vector<2x16x1xf32>
    %51 = vector.broadcast %50 : vector<2x16x1xf32> to vector<2x16x16xf32>
    %52 = arith.mulf %47, %51 : vector<2x16x16xf32>
    %53 = arith.truncf %52 : vector<2x16x16xf32> to vector<2x16x16xbf16>
    "tpu.trace_start"() <{level = 10 : i32, message = "bts,bsd->btd"}> : () -> ()
    %cst_12 = arith.constant dense<0.000000e+00> : vector<2x16x32xf32>
    %54 = tpu.matmul %53, %38, %cst_12 {dimension_numbers = #tpu.dot_dimension_numbers<[2], [1], [1], [2], [0, 0, 0, 1, 1, 2], [0], [0]>} : vector<2x16x16xbf16>, vector<2x16x32xbf16>, vector<2x16x32xf32> -> vector<2x16x32xf32>
    "tpu.trace_stop"() : () -> ()
    %55 = vector.extract_strided_slice %4 {offsets = [0, 0, 64], sizes = [2, 16, 32], strides = [1, 1, 1]} : vector<2x16x384xf32> to vector<2x16x32xf32>
    %56 = arith.truncf %55 : vector<2x16x32xf32> to vector<2x16x32xbf16>
    %57 = vector.extract_strided_slice %4 {offsets = [0, 0, 192], sizes = [2, 16, 32], strides = [1, 1, 1]} : vector<2x16x384xf32> to vector<2x16x32xf32>
    %58 = arith.truncf %57 : vector<2x16x32xf32> to vector<2x16x32xbf16>
    %59 = vector.extract_strided_slice %4 {offsets = [0, 0, 320], sizes = [2, 16, 32], strides = [1, 1, 1]} : vector<2x16x384xf32> to vector<2x16x32xf32>
    %60 = arith.truncf %59 : vector<2x16x32xf32> to vector<2x16x32xbf16>
    "tpu.trace_start"() <{level = 10 : i32, message = "btd,bsd->bts"}> : () -> ()
    %cst_13 = arith.constant dense<0.000000e+00> : vector<2x16x16xf32>
    %61 = tpu.matmul %56, %58, %cst_13 {dimension_numbers = #tpu.dot_dimension_numbers<[2], [2], [1], [1], [0, 0, 0, 1, 1, 1], [0], [0]>} : vector<2x16x32xbf16>, vector<2x16x32xbf16>, vector<2x16x16xf32> -> vector<2x16x16xf32>
    "tpu.trace_stop"() : () -> ()
    %62 = vector.shape_cast %10 : vector<16x16xf32> to vector<1x16x16xf32>
    %63 = vector.broadcast %62 : vector<1x16x16xf32> to vector<2x16x16xf32>
    %64 = arith.addf %61, %63 : vector<2x16x16xf32>
    %cst_14 = arith.constant dense<0xFF800000> : vector<2x16xf32>
    %65 = vector.multi_reduction <maximumf>, %64, %cst_14 [2] : vector<2x16x16xf32> to vector<2x16xf32>
    %66 = vector.shape_cast %65 : vector<2x16xf32> to vector<2x16x1xf32>
    %67 = vector.broadcast %66 : vector<2x16x1xf32> to vector<2x16x16xf32>
    %68 = arith.subf %64, %67 : vector<2x16x16xf32>
    %69 = math.exp %68 : vector<2x16x16xf32>
    %cst_15 = arith.constant dense<0.000000e+00> : vector<2x16xf32>
    %70 = vector.multi_reduction <add>, %69, %cst_15 [2] : vector<2x16x16xf32> to vector<2x16xf32>
    %71 = vector.shape_cast %70 : vector<2x16xf32> to vector<2x16x1xf32>
    %72 = tpu.reciprocal %71 {approx = true} : vector<2x16x1xf32> -> vector<2x16x1xf32>
    %73 = vector.broadcast %72 : vector<2x16x1xf32> to vector<2x16x16xf32>
    %74 = arith.mulf %69, %73 : vector<2x16x16xf32>
    %75 = arith.truncf %74 : vector<2x16x16xf32> to vector<2x16x16xbf16>
    "tpu.trace_start"() <{level = 10 : i32, message = "bts,bsd->btd"}> : () -> ()
    %cst_16 = arith.constant dense<0.000000e+00> : vector<2x16x32xf32>
    %76 = tpu.matmul %75, %60, %cst_16 {dimension_numbers = #tpu.dot_dimension_numbers<[2], [1], [1], [2], [0, 0, 0, 1, 1, 2], [0], [0]>} : vector<2x16x16xbf16>, vector<2x16x32xbf16>, vector<2x16x32xf32> -> vector<2x16x32xf32>
    "tpu.trace_stop"() : () -> ()
    %77 = vector.extract_strided_slice %4 {offsets = [0, 0, 96], sizes = [2, 16, 32], strides = [1, 1, 1]} : vector<2x16x384xf32> to vector<2x16x32xf32>
    %78 = arith.truncf %77 : vector<2x16x32xf32> to vector<2x16x32xbf16>
    %79 = vector.extract_strided_slice %4 {offsets = [0, 0, 224], sizes = [2, 16, 32], strides = [1, 1, 1]} : vector<2x16x384xf32> to vector<2x16x32xf32>
    %80 = arith.truncf %79 : vector<2x16x32xf32> to vector<2x16x32xbf16>
    %81 = vector.extract_strided_slice %4 {offsets = [0, 0, 352], sizes = [2, 16, 32], strides = [1, 1, 1]} : vector<2x16x384xf32> to vector<2x16x32xf32>
    %82 = arith.truncf %81 : vector<2x16x32xf32> to vector<2x16x32xbf16>
    "tpu.trace_start"() <{level = 10 : i32, message = "btd,bsd->bts"}> : () -> ()
    %cst_17 = arith.constant dense<0.000000e+00> : vector<2x16x16xf32>
    %83 = tpu.matmul %78, %80, %cst_17 {dimension_numbers = #tpu.dot_dimension_numbers<[2], [2], [1], [1], [0, 0, 0, 1, 1, 1], [0], [0]>} : vector<2x16x32xbf16>, vector<2x16x32xbf16>, vector<2x16x16xf32> -> vector<2x16x16xf32>
    "tpu.trace_stop"() : () -> ()
    %84 = vector.shape_cast %10 : vector<16x16xf32> to vector<1x16x16xf32>
    %85 = vector.broadcast %84 : vector<1x16x16xf32> to vector<2x16x16xf32>
    %86 = arith.addf %83, %85 : vector<2x16x16xf32>
    %cst_18 = arith.constant dense<0xFF800000> : vector<2x16xf32>
    %87 = vector.multi_reduction <maximumf>, %86, %cst_18 [2] : vector<2x16x16xf32> to vector<2x16xf32>
    %88 = vector.shape_cast %87 : vector<2x16xf32> to vector<2x16x1xf32>
    %89 = vector.broadcast %88 : vector<2x16x1xf32> to vector<2x16x16xf32>
    %90 = arith.subf %86, %89 : vector<2x16x16xf32>
    %91 = math.exp %90 : vector<2x16x16xf32>
    %cst_19 = arith.constant dense<0.000000e+00> : vector<2x16xf32>
    %92 = vector.multi_reduction <add>, %91, %cst_19 [2] : vector<2x16x16xf32> to vector<2x16xf32>
    %93 = vector.shape_cast %92 : vector<2x16xf32> to vector<2x16x1xf32>
    %94 = tpu.reciprocal %93 {approx = true} : vector<2x16x1xf32> -> vector<2x16x1xf32>
    %95 = vector.broadcast %94 : vector<2x16x1xf32> to vector<2x16x16xf32>
    %96 = arith.mulf %91, %95 : vector<2x16x16xf32>
    %97 = arith.truncf %96 : vector<2x16x16xf32> to vector<2x16x16xbf16>
    "tpu.trace_start"() <{level = 10 : i32, message = "bts,bsd->btd"}> : () -> ()
    %cst_20 = arith.constant dense<0.000000e+00> : vector<2x16x32xf32>
    %98 = tpu.matmul %97, %82, %cst_20 {dimension_numbers = #tpu.dot_dimension_numbers<[2], [1], [1], [2], [0, 0, 0, 1, 1, 2], [0], [0]>} : vector<2x16x16xbf16>, vector<2x16x32xbf16>, vector<2x16x32xf32> -> vector<2x16x32xf32>
    "tpu.trace_stop"() : () -> ()
    %99 = tpu.concatenate %32, %54, %76, %98 in 2 : vector<2x16x32xf32>, vector<2x16x32xf32>, vector<2x16x32xf32>, vector<2x16x32xf32> -> vector<2x16x128xf32>
    %c0_21 = arith.constant 0 : index
    %c0_22 = arith.constant 0 : index
    %c0_23 = arith.constant 0 : index
    %100 = vector.load %arg3[%c0_21, %c0_22, %c0_23] : memref<2x16x128xf32, #tpu.memory_space<vmem>>, vector<2x16x128xf32>
    tpu.vector_store %arg3[%c0_21, %c0_22, %c0_23], %99 {strides = array<i32>} : memref<2x16x128xf32, #tpu.memory_space<vmem>>, vector<2x16x128xf32>,
    return
  }
  func.func @transform_0(%arg0: i32) -> (i32, i32) {
    %c0_i32 = arith.constant 0 : i32
    %c0_i32_0 = arith.constant 0 : i32
    return %arg0, %c0_i32 : i32, i32
  }
  func.func @transform_1(%arg0: i32) -> (i32, i32) {
    %c0_i32 = arith.constant 0 : i32
    %c0_i32_0 = arith.constant 0 : i32
    %c0_i32_1 = arith.constant 0 : i32
    return %c0_i32, %c0_i32_0 : i32, i32
  }
  func.func @transform_2(%arg0: i32) -> (i32, i32, i32) {
    %c0_i32 = arith.constant 0 : i32
    %c0_i32_0 = arith.constant 0 : i32
    %c0_i32_1 = arith.constant 0 : i32
    return %arg0, %c0_i32, %c0_i32_0 : i32, i32, i32
  }
}

</mosaic_0001>

<llo_original>
// kernel: tpu_custom_call.1
$region0: #{tpu_custom_call.1}
  #allocation0 [shape = 'u32[]', space=smem, size = 0x4, offset = 0x4, fixed_abs, tag = 'smem constant byte address 0x4 - core index']
  #allocation1 [shape = 'u32[144,128]{1,0:T(1,128)}', space=vmem, size = 0x12000, scoped, tag = 'internal scratch']
  %s0 = inlined_call_operand.hbm [shape: f32[32,128], index: 0, kind: input, shape index: {}]
  %s1 = inlined_call_operand.hbm [shape: bf16[128,384], index: 1, kind: input, shape index: {}]
  %s2 = inlined_call_operand.hbm [shape: f32[2,16,128], index: 2, kind: output, shape index: {}]
  %s3 = sld [smem:[#allocation0]]
  $region26: #{tpu_custom_call.1} parent=0
    _
  %s5 = ssub.s32 1, %s3
  %s6 = scalar_select 0, %s5, %s3
  $region1: #{tpu_custom_call.1} parent=0
    #allocation2 [shape = 'u8[16384]{0}', space=vmem, size = 0x4000, scoped, tag = 'input window, operand 0, single buffered']
    #allocation3 [shape = 's32[1]{0}', space=sflag, size = 0x4, scoped, tag = 'scoped memory for tpu_custom_call.1']
    #allocation4 [shape = 's32[1]{0}', space=sflag, size = 0x4, scoped, tag = 'scoped memory for tpu_custom_call.1']
    #allocation5 [shape = 'u8[98304]{0}', space=vmem, size = 0x18000, scoped, tag = 'input window, operand 1, single buffered']
    #allocation6 [shape = 's32[1]{0}', space=sflag, size = 0x4, scoped, tag = 'scoped memory for tpu_custom_call.1']
    #allocation7 [shape = 'u8[16384]{0}', space=vmem, size = 0x4000, scoped, tag = 'output window, operand 0, single buffered']
    %7 = vsyncpa [#allocation3], 0
    %8 = vsyncpa [#allocation6], 0
    %9 = vsyncpa [#allocation4], 0
    // Predicated region
    $region2: #{tpu_custom_call.1} parent=1 // pred_check
      _
    $region3: #{tpu_custom_call.1} parent=1 // pred_check_branch
      %11 = sbr.rel (0) target = $region5
    $region4: #{tpu_custom_call.1} parent=1 // pred_region
      %s13 = ssub.s32 512, 512
      %14 = vsyncadd [#allocation3], %s13
      %s15 = sshll.u32 [#allocation2], 4
      %s16 = int_to_ptr.vmem [resolvable:$true] %s15
      %21 = dma.hbm_to_vmem [thread:$0]  %s0, 512, %s16, [#allocation3], 128, 128, 8
    $region5: #{tpu_custom_call.1} parent=1 // pred_fallthru
      _
    // Predicated region
    $region6: #{tpu_custom_call.1} parent=1 // pred_check
      _
    $region7: #{tpu_custom_call.1} parent=1 // pred_check_branch
      %23 = sbr.rel (0) target = $region9
    $region8: #{tpu_custom_call.1} parent=1 // pred_region
      %s25 = ssub.s32 3072, 3072
      %26 = vsyncadd [#allocation6], %s25
      %s27 = sshll.u32 [#allocation5], 4
      %s28 = int_to_ptr.vmem [resolvable:$true] %s27
      %33 = dma.hbm_to_vmem [thread:$0]  %s1, 3072, %s28, [#allocation6], 192, 192, 12
    $region9: #{tpu_custom_call.1} parent=1 // pred_fallthru
      _
    // Predicated region
    $region10: #{tpu_custom_call.1} parent=1 // pred_check
      _
    $region11: #{tpu_custom_call.1} parent=1 // pred_check_branch
      %35 = sbr.rel (0) target = $region13
    $region12: #{tpu_custom_call.1} parent=1 // pred_region
      %36 = dma.done [#allocation3], 512
    $region13: #{tpu_custom_call.1} parent=1 // pred_fallthru
      _
    // Predicated region
    $region14: #{tpu_custom_call.1} parent=1 // pred_check
      _
    $region15: #{tpu_custom_call.1} parent=1 // pred_check_branch
      %38 = sbr.rel (0) target = $region17
    $region16: #{tpu_custom_call.1} parent=1 // pred_region
      %39 = dma.done [#allocation6], 3072
    $region17: #{tpu_custom_call.1} parent=1 // pred_fallthru
      _
    %v41 = vld [vmem:[#allocation2] sm:$0xff]
    %v42 = vld [vmem:[#allocation2 + $0x8] sm:$0xff]
    %v43 = vld [vmem:[#allocation2 + $0x10] sm:$0xff]
    %v44 = vld [vmem:[#allocation2 + $0x18] sm:$0xff]
    %v45 = vpack.c.bf16 %v42, %v41
    %v46 = vpack.c.bf16 %v44, %v43
    %v47 = vld [vmem:[#allocation5] sm:$0xff]
    %v48 = vld [vmem:[#allocation5 + $0x8] sm:$0xf]
    %v49 = vld [vmem:[#allocation5 + $0xc] sm:$0xff]
    %v50 = vld [vmem:[#allocation5 + $0x14] sm:$0xf]
    %v51 = vld [vmem:[#allocation5 + $0x18] sm:$0xff]
    %v52 = vld [vmem:[#allocation5 + $0x20] sm:$0xf]
    %v53 = vld [vmem:[#allocation5 + $0x24] sm:$0xff]
    %v54 = vld [vmem:[#allocation5 + $0x2c] sm:$0xf]
    %v55 = vld [vmem:[#allocation5 + $0x30] sm:$0xff]
    %v56 = vld [vmem:[#allocation5 + $0x38] sm:$0xf]
    %v57 = vld [vmem:[#allocation5 + $0x3c] sm:$0xff]
    %v58 = vld [vmem:[#allocation5 + $0x44] sm:$0xf]
    %v59 = vld [vmem:[#allocation5 + $0x48] sm:$0xff]
    %v60 = vld [vmem:[#allocation5 + $0x50] sm:$0xf]
    %v61 = vld [vmem:[#allocation5 + $0x54] sm:$0xff]
    %v62 = vld [vmem:[#allocation5 + $0x5c] sm:$0xf]
    %v63 = vld [vmem:[#allocation5 + $0x60] sm:$0xff]
    %v64 = vld [vmem:[#allocation5 + $0x68] sm:$0xf]
    %v65 = vld [vmem:[#allocation5 + $0x6c] sm:$0xff]
    %v66 = vld [vmem:[#allocation5 + $0x74] sm:$0xf]
    %v67 = vld [vmem:[#allocation5 + $0x78] sm:$0xff]
    %v68 = vld [vmem:[#allocation5 + $0x80] sm:$0xf]
    %v69 = vld [vmem:[#allocation5 + $0x84] sm:$0xff]
    %v70 = vld [vmem:[#allocation5 + $0x8c] sm:$0xf]
    %v71 = vld [vmem:[#allocation5 + $0x90] sm:$0xff]
    %v72 = vld [vmem:[#allocation5 + $0x98] sm:$0xf]
    %v73 = vld [vmem:[#allocation5 + $0x9c] sm:$0xff]
    %v74 = vld [vmem:[#allocation5 + $0xa4] sm:$0xf]
    %v75 = vld [vmem:[#allocation5 + $0xa8] sm:$0xff]
    %v76 = vld [vmem:[#allocation5 + $0xb0] sm:$0xf]
    %v77 = vld [vmem:[#allocation5 + $0xb4] sm:$0xff]
    %v78 = vld [vmem:[#allocation5 + $0xbc] sm:$0xf]
    %v111 = vunpack.c.l.b16 %v47
    %v112 = vunpack.c.h.b16 %v47
    %v113 = vunpack.c.l.b16 %v48
    %v114 = vunpack.c.l.b16 %v49
    %v115 = vunpack.c.h.b16 %v49
    %v116 = vunpack.c.l.b16 %v50
    %v117 = vunpack.c.l.b16 %v51
    %v118 = vunpack.c.h.b16 %v51
    %v119 = vunpack.c.l.b16 %v52
    %v120 = vunpack.c.l.b16 %v53
    %v121 = vunpack.c.h.b16 %v53
    %v122 = vunpack.c.l.b16 %v54
    %v123 = vunpack.c.l.b16 %v55
    %v124 = vunpack.c.h.b16 %v55
    %v125 = vunpack.c.l.b16 %v56
    %v126 = vunpack.c.l.b16 %v57
    %v127 = vunpack.c.h.b16 %v57
    %v128 = vunpack.c.l.b16 %v58
    %v129 = vunpack.c.l.b16 %v59
    %v130 = vunpack.c.h.b16 %v59
    %v131 = vunpack.c.l.b16 %v60
    %v132 = vunpack.c.l.b16 %v61
    %v133 = vunpack.c.h.b16 %v61
    %v134 = vunpack.c.l.b16 %v62
    %v135 = vunpack.c.l.b16 %v63
    %v136 = vunpack.c.h.b16 %v63
    %v137 = vunpack.c.l.b16 %v64
    %v138 = vunpack.c.l.b16 %v65
    %v139 = vunpack.c.h.b16 %v65
    %v140 = vunpack.c.l.b16 %v66
    %v141 = vunpack.c.l.b16 %v67
    %v142 = vunpack.c.h.b16 %v67
    %v143 = vunpack.c.l.b16 %v68
    %v144 = vunpack.c.l.b16 %v69
    %v145 = vunpack.c.h.b16 %v69
    %v146 = vunpack.c.l.b16 %v70
    %v147 = vunpack.c.l.b16 %v71
    %v148 = vunpack.c.h.b16 %v71
    %v149 = vunpack.c.l.b16 %v72
    %v150 = vunpack.c.l.b16 %v73
    %v151 = vunpack.c.h.b16 %v73
    %v152 = vunpack.c.l.b16 %v74
    %v153 = vunpack.c.l.b16 %v75
    %v154 = vunpack.c.h.b16 %v75
    %v155 = vunpack.c.l.b16 %v76
    %v156 = vunpack.c.l.b16 %v77
    %v157 = vunpack.c.h.b16 %v77
    %v158 = vunpack.c.l.b16 %v78
    %v159 = vpack.c.b16 %v114, %v111
    %v160 = vpack.c.b16 %v115, %v112
    %v161 = vpack.c.b16 %v116, %v113
    %v162 = vpack.c.b16 %v120, %v117
    %v163 = vpack.c.b16 %v121, %v118
    %v164 = vpack.c.b16 %v122, %v119
    %v165 = vpack.c.b16 %v126, %v123
    %v166 = vpack.c.b16 %v127, %v124
    %v167 = vpack.c.b16 %v128, %v125
    %v168 = vpack.c.b16 %v132, %v129
    %v169 = vpack.c.b16 %v133, %v130
    %v170 = vpack.c.b16 %v134, %v131
    %v171 = vpack.c.b16 %v138, %v135
    %v172 = vpack.c.b16 %v139, %v136
    %v173 = vpack.c.b16 %v140, %v137
    %v174 = vpack.c.b16 %v144, %v141
    %v175 = vpack.c.b16 %v145, %v142
    %v176 = vpack.c.b16 %v146, %v143
    %v177 = vpack.c.b16 %v150, %v147
    %v178 = vpack.c.b16 %v151, %v148
    %v179 = vpack.c.b16 %v152, %v149
    %v180 = vpack.c.b16 %v156, %v153
    %v181 = vpack.c.b16 %v157, %v154
    %v182 = vpack.c.b16 %v158, %v155
    %207 = vmatprep.subr.bf16.mxu0 %v160
    %208 = vmatpush1.bf16.msra.mxu0 %v159
    %209 = vmatprep.subr.bf16.mxu0 %v163
    %210 = vmatpush1.bf16.msra.mxu0 %v162
    %211 = vmatprep.subr.bf16.mxu0 %v166
    %212 = vmatpush1.bf16.msra.mxu0 %v165
    %213 = vmatprep.subr.bf16.mxu0 %v169
    %214 = vmatpush1.bf16.msra.mxu0 %v168
    %215 = vmatprep.subr.bf16.mxu0 %v172
    %216 = vmatpush1.bf16.msra.mxu0 %v171
    %217 = vmatprep.subr.bf16.mxu0 %v175
    %218 = vmatpush1.bf16.msra.mxu0 %v174
    %219 = vmatprep.subr.bf16.mxu0 %v178
    %220 = vmatpush1.bf16.msra.mxu0 %v177
    %221 = vmatprep.subr.bf16.mxu0 %v181
    %222 = vmatpush1.bf16.msra.mxu0 %v180
    %223 = vmatprep.subr.bf16.mxu0 0
    %224 = vmatpush1.bf16.msra.mxu0 0
    %225 = vmatprep.subr.bf16.mxu0 0
    %226 = vmatpush1.bf16.msra.mxu0 0
    %227 = vmatprep.subr.bf16.mxu0 0
    %228 = vmatpush1.bf16.msra.mxu0 0
    %229 = vmatprep.subr.bf16.mxu0 0
    %230 = vmatpush1.bf16.msra.mxu0 0
    %231 = vmatprep.subr.bf16.mxu0 0
    %232 = vmatpush1.bf16.msra.mxu0 0
    %233 = vmatprep.subr.bf16.mxu0 0
    %234 = vmatpush1.bf16.msra.mxu0 0
    %235 = vmatprep.subr.bf16.mxu0 0
    %236 = vmatpush1.bf16.msra.mxu0 0
    %237 = vmatprep.subr.bf16.mxu0 0
    %238 = vmatpush1.bf16.msra.mxu0 0
    %239 = vmatprep.mubr.bf16.mxu0 0
    %240 = vmatmul.mubr.bf16.gmra.mrb[0].mxu0 %v45
    %v241 = vpop.f32.mrb[0].mxu0
    %v242 = vadd.f32 0.0, %v241
    %v243 = vpop.f32.mrb[0].mxu0
    %v244 = vadd.f32 0.0, %v243
    %v245 = vpop.f32.mrb[0].mxu0
    %v246 = vadd.f32 0.0, %v245
    %v247 = vpop.f32.mrb[0].mxu0
    %v248 = vadd.f32 0.0, %v247
    %249 = vmatprep.mubr.bf16.mxu0 0
    %250 = vmatmul.mubr.bf16.gmra.mrb[0].mxu0 %v46
    %v251 = vpop.f32.mrb[0].mxu0
    %v252 = vadd.f32 0.0, %v251
    %v253 = vpop.f32.mrb[0].mxu0
    %v254 = vadd.f32 0.0, %v253
    %v255 = vpop.f32.mrb[0].mxu0
    %v256 = vadd.f32 0.0, %v255
    %v257 = vpop.f32.mrb[0].mxu0
    %v258 = vadd.f32 0.0, %v257
    %259 = vdwg.mxu0
    %260 = vmatprep.subr.bf16.mxu0 0
    %261 = vmatpush1.bf16.msra.mxu0 %v161
    %262 = vmatprep.subr.bf16.mxu0 0
    %263 = vmatpush1.bf16.msra.mxu0 %v164
    %264 = vmatprep.subr.bf16.mxu0 0
    %265 = vmatpush1.bf16.msra.mxu0 %v167
    %266 = vmatprep.subr.bf16.mxu0 0
    %267 = vmatpush1.bf16.msra.mxu0 %v170
    %268 = vmatprep.subr.bf16.mxu0 0
    %269 = vmatpush1.bf16.msra.mxu0 %v173
    %270 = vmatprep.subr.bf16.mxu0 0
    %271 = vmatpush1.bf16.msra.mxu0 %v176
    %272 = vmatprep.subr.bf16.mxu0 0
    %273 = vmatpush1.bf16.msra.mxu0 %v179
    %274 = vmatprep.subr.bf16.mxu0 0
    %275 = vmatpush1.bf16.msra.mxu0 %v182
    %276 = vmatprep.subr.bf16.mxu0 0
    %277 = vmatpush1.bf16.msra.mxu0 0
    %278 = vmatprep.subr.bf16.mxu0 0
    %279 = vmatpush1.bf16.msra.mxu0 0
    %280 = vmatprep.subr.bf16.mxu0 0
    %281 = vmatpush1.bf16.msra.mxu0 0
    %282 = vmatprep.subr.bf16.mxu0 0
    %283 = vmatpush1.bf16.msra.mxu0 0
    %284 = vmatprep.subr.bf16.mxu0 0
    %285 = vmatpush1.bf16.msra.mxu0 0
    %286 = vmatprep.subr.bf16.mxu0 0
    %287 = vmatpush1.bf16.msra.mxu0 0
    %288 = vmatprep.subr.bf16.mxu0 0
    %289 = vmatpush1.bf16.msra.mxu0 0
    %290 = vmatprep.subr.bf16.mxu0 0
    %291 = vmatpush1.bf16.msra.mxu0 0
    %292 = vmatprep.mubr.bf16.mxu0 0
    %293 = vmatmul.mubr.bf16.gmra.mrb[0].mxu0 %v45
    %v294 = vpop.f32.mrb[0].mxu0
    %v295 = vadd.f32 0.0, %v294
    %v296 = vpop.f32.mrb[0].mxu0
    %v297 = vpop.f32.mrb[0].mxu0
    %v298 = vadd.f32 0.0, %v297
    %v299 = vpop.f32.mrb[0].mxu0
    %300 = vmatprep.mubr.bf16.mxu0 0
    %301 = vmatmul.mubr.bf16.gmra.mrb[0].mxu0 %v46
    %v302 = vpop.f32.mrb[0].mxu0
    %v303 = vadd.f32 0.0, %v302
    %v304 = vpop.f32.mrb[0].mxu0
    %v305 = vpop.f32.mrb[0].mxu0
    %v306 = vadd.f32 0.0, %v305
    %v307 = vpop.f32.mrb[0].mxu0
    %308 = vdwg.mxu0
    %v309 = vlaneseq
    %v310 = vshrl.u32 %v309, 7
    %v311 = vadd.s32 %v310, 8
    %v312 = vlaneseq
    %v313 = vand.u32 %v312, 127
    %vm314 = vcmp.ge.s32.totalorder %v310, %v313
    %vm315 = vcmp.ge.s32.totalorder %v311, %v313
    %v316 = vsel %vm314, 0.0, -1e+30
    %v317 = vsel %vm315, 0.0, -1e+30
    %v318 = vpack.c.bf16 %v246, %v242
    %v319 = vpack.c.bf16 %v256, %v252
    %v320 = vpack.c.bf16 %v248, %v244
    %v321 = vpack.c.bf16 %v258, %v254
    %v322 = vpack.c.bf16 %v298, %v295
    %v323 = vpack.c.bf16 %v306, %v303
    %vm324 = vcmask 261120
    %v326 = vsel %vm324, %v318, 0
    %v329 = vsel %vm324, %v320, 0
    %331 = vmatprep.subr.bf16.mxu0 0
    %332 = vmatpush1.bf16.xpose.msra.mxu0 %v329
    %333 = vmatprep.subr.bf16.mxu0 0
    %334 = vmatpush1.bf16.xpose.msra.mxu0 0
    %335 = vmatprep.subr.bf16.mxu0 0
    %336 = vmatpush1.bf16.xpose.msra.mxu0 0
    %337 = vmatprep.subr.bf16.mxu0 0
    %338 = vmatpush1.bf16.xpose.msra.mxu0 0
    %339 = vmatprep.subr.bf16.mxu0 0
    %340 = vmatpush1.bf16.xpose.msra.mxu0 0
    %341 = vmatprep.subr.bf16.mxu0 0
    %342 = vmatpush1.bf16.xpose.msra.mxu0 0
    %343 = vmatprep.subr.bf16.mxu0 0
    %344 = vmatpush1.bf16.xpose.msra.mxu0 0
    %345 = vmatprep.subr.bf16.mxu0 0
    %346 = vmatpush1.bf16.xpose.msra.mxu0 0
    %347 = vmatprep.subr.bf16.mxu0 0
    %348 = vmatpush1.bf16.xpose.msra.mxu0 0
    %349 = vmatprep.subr.bf16.mxu0 0
    %350 = vmatpush1.bf16.xpose.msra.mxu0 0
    %351 = vmatprep.subr.bf16.mxu0 0
    %352 = vmatpush1.bf16.xpose.msra.mxu0 0
    %353 = vmatprep.subr.bf16.mxu0 0
    %354 = vmatpush1.bf16.xpose.msra.mxu0 0
    %355 = vmatprep.subr.bf16.mxu0 0
    %356 = vmatpush1.bf16.xpose.msra.mxu0 0
    %357 = vmatprep.subr.bf16.mxu0 0
    %358 = vmatpush1.bf16.xpose.msra.mxu0 0
    %359 = vmatprep.subr.bf16.mxu0 0
    %360 = vmatpush1.bf16.xpose.msra.mxu0 0
    %361 = vmatprep.subr.bf16.mxu0 0
    %362 = vmatpush1.bf16.xpose.msra.mxu0 0
    %363 = vmatprep.mubr.bf16.mxu0 0
    %364 = vmatmul.mubr.bf16.gmra.mrb[0].mxu0 %v326
    %v365 = vpop.f32.mrb[0].mxu0
    %v366 = vadd.f32 %v316, %v365
    %v367 = vpop.f32.mrb[0].mxu0
    %v368 = vpop.f32.mrb[0].mxu0
    %v369 = vadd.f32 %v317, %v368
    %v370 = vpop.f32.mrb[0].mxu0
    %371 = vdwg.mxu0
    %v373 = vsel %vm324, %v319, 0
    %v376 = vsel %vm324, %v321, 0
    %378 = vmatprep.subr.bf16.mxu0 0
    %379 = vmatpush1.bf16.xpose.msra.mxu0 %v376
    %380 = vmatprep.subr.bf16.mxu0 0
    %381 = vmatpush1.bf16.xpose.msra.mxu0 0
    %382 = vmatprep.subr.bf16.mxu0 0
    %383 = vmatpush1.bf16.xpose.msra.mxu0 0
    %384 = vmatprep.subr.bf16.mxu0 0
    %385 = vmatpush1.bf16.xpose.msra.mxu0 0
    %386 = vmatprep.subr.bf16.mxu0 0
    %387 = vmatpush1.bf16.xpose.msra.mxu0 0
    %388 = vmatprep.subr.bf16.mxu0 0
    %389 = vmatpush1.bf16.xpose.msra.mxu0 0
    %390 = vmatprep.subr.bf16.mxu0 0
    %391 = vmatpush1.bf16.xpose.msra.mxu0 0
    %392 = vmatprep.subr.bf16.mxu0 0
    %393 = vmatpush1.bf16.xpose.msra.mxu0 0
    %394 = vmatprep.subr.bf16.mxu0 0
    %395 = vmatpush1.bf16.xpose.msra.mxu0 0
    %396 = vmatprep.subr.bf16.mxu0 0
    %397 = vmatpush1.bf16.xpose.msra.mxu0 0
    %398 = vmatprep.subr.bf16.mxu0 0
    %399 = vmatpush1.bf16.xpose.msra.mxu0 0
    %400 = vmatprep.subr.bf16.mxu0 0
    %401 = vmatpush1.bf16.xpose.msra.mxu0 0
    %402 = vmatprep.subr.bf16.mxu0 0
    %403 = vmatpush1.bf16.xpose.msra.mxu0 0
    %404 = vmatprep.subr.bf16.mxu0 0
    %405 = vmatpush1.bf16.xpose.msra.mxu0 0
    %406 = vmatprep.subr.bf16.mxu0 0
    %407 = vmatpush1.bf16.xpose.msra.mxu0 0
    %408 = vmatprep.subr.bf16.mxu0 0
    %409 = vmatpush1.bf16.xpose.msra.mxu0 0
    %410 = vmatprep.mubr.bf16.mxu0 0
    %411 = vmatmul.mubr.bf16.gmra.mrb[0].mxu0 %v373
    %v412 = vpop.f32.mrb[0].mxu0
    %v413 = vadd.f32 %v316, %v412
    %v414 = vpop.f32.mrb[0].mxu0
    %v415 = vpop.f32.mrb[0].mxu0
    %v416 = vadd.f32 %v317, %v415
    %v417 = vpop.f32.mrb[0].mxu0
    %418 = vdwg.mxu0
    %vm419 = vcmask 130048
    %v420 = vsel %vm419, %v366, -inf
    %421 = vmax.xlane.f32.xlu0 %v420
    %v422 = vpop.xlane.xlu0 %421
    %v423 = vsel %vm419, %v369, -inf
    %424 = vmax.xlane.f32.xlu0 %v423
    %v425 = vpop.xlane.xlu0 %424
    %v426 = vsel %vm419, %v413, -inf
    %427 = vmax.xlane.f32.xlu0 %v426
    %v428 = vpop.xlane.xlu0 %427
    %v429 = vsel %vm419, %v416, -inf
    %430 = vmax.xlane.f32.xlu0 %v429
    %v431 = vpop.xlane.xlu0 %430
    %v432 = vsub.f32 %v366, %v422
    %v433 = vsub.f32 %v369, %v425
    %v434 = vsub.f32 %v413, %v428
    %v435 = vsub.f32 %v416, %v431
    %v436 = vmul.f32 %v432, 1.442695
    %v437 = vpow.pop %v436
    %v438 = vmul.f32 %v433, 1.442695
    %v439 = vpow.pop %v438
    %v440 = vmul.f32 %v434, 1.442695
    %v441 = vpow.pop %v440
    %v442 = vmul.f32 %v435, 1.442695
    %v443 = vpow.pop %v442
    %v444 = vsel %vm419, %v437, 0.0
    %445 = vadd.xlane.f32.xlu0 %v444
    %v446 = vpop.xlane.xlu0 %445
    %v447 = vsel %vm419, %v439, 0.0
    %448 = vadd.xlane.f32.xlu0 %v447
    %v449 = vpop.xlane.xlu0 %448
    %v450 = vsel %vm419, %v441, 0.0
    %451 = vadd.xlane.f32.xlu0 %v450
    %v452 = vpop.xlane.xlu0 %451
    %v453 = vsel %vm419, %v443, 0.0
    %454 = vadd.xlane.f32.xlu0 %v453
    %v455 = vpop.xlane.xlu0 %454
    %v456 = vrcp.pop %v446
    %v457 = vrcp.pop %v449
    %v458 = vrcp.pop %v452
    %v459 = vrcp.pop %v455
    %v460 = vmul.f32 %v437, %v456
    %v461 = vmul.f32 %v439, %v457
    %v462 = vmul.f32 %v441, %v458
    %v463 = vmul.f32 %v443, %v459
    %v464 = vpack.c.bf16 %v461, %v460
    %v465 = vpack.c.bf16 %v463, %v462
    %v467 = vsel %vm419, %v464, 0
    %469 = vmatprep.subr.bf16.mxu0 0
    %470 = vmatpush1.bf16.msra.mxu0 %v322
    %471 = vmatprep.subr.bf16.mxu0 0
    %472 = vmatpush1.bf16.msra.mxu0 0
    %473 = vmatprep.subr.bf16.mxu0 0
    %474 = vmatpush1.bf16.msra.mxu0 0
    %475 = vmatprep.subr.bf16.mxu0 0
    %476 = vmatpush1.bf16.msra.mxu0 0
    %477 = vmatprep.subr.bf16.mxu0 0
    %478 = vmatpush1.bf16.msra.mxu0 0
    %479 = vmatprep.subr.bf16.mxu0 0
    %480 = vmatpush1.bf16.msra.mxu0 0
    %481 = vmatprep.subr.bf16.mxu0 0
    %482 = vmatpush1.bf16.msra.mxu0 0
    %483 = vmatprep.subr.bf16.mxu0 0
    %484 = vmatpush1.bf16.msra.mxu0 0
    %485 = vmatprep.subr.bf16.mxu0 0
    %486 = vmatpush1.bf16.msra.mxu0 0
    %487 = vmatprep.subr.bf16.mxu0 0
    %488 = vmatpush1.bf16.msra.mxu0 0
    %489 = vmatprep.subr.bf16.mxu0 0
    %490 = vmatpush1.bf16.msra.mxu0 0
    %491 = vmatprep.subr.bf16.mxu0 0
    %492 = vmatpush1.bf16.msra.mxu0 0
    %493 = vmatprep.subr.bf16.mxu0 0
    %494 = vmatpush1.bf16.msra.mxu0 0
    %495 = vmatprep.subr.bf16.mxu0 0
    %496 = vmatpush1.bf16.msra.mxu0 0
    %497 = vmatprep.subr.bf16.mxu0 0
    %498 = vmatpush1.bf16.msra.mxu0 0
    %499 = vmatprep.subr.bf16.mxu0 0
    %500 = vmatpush1.bf16.msra.mxu0 0
    %501 = vmatprep.mubr.bf16.mxu0 0
    %502 = vmatmul.mubr.bf16.gmra.mrb[0].mxu0 %v467
    %v503 = vpop.f32.mrb[0].mxu0
    %v504 = vadd.f32 0.0, %v503
    %v505 = vpop.f32.mrb[0].mxu0
    %v506 = vpop.f32.mrb[0].mxu0
    %v507 = vadd.f32 0.0, %v506
    %v508 = vpop.f32.mrb[0].mxu0
    %509 = vdwg.mxu0
    %v511 = vsel %vm419, %v465, 0
    %513 = vmatprep.subr.bf16.mxu0 0
    %514 = vmatpush1.bf16.msra.mxu0 %v323
    %515 = vmatprep.subr.bf16.mxu0 0
    %516 = vmatpush1.bf16.msra.mxu0 0
    %517 = vmatprep.subr.bf16.mxu0 0
    %518 = vmatpush1.bf16.msra.mxu0 0
    %519 = vmatprep.subr.bf16.mxu0 0
    %520 = vmatpush1.bf16.msra.mxu0 0
    %521 = vmatprep.subr.bf16.mxu0 0
    %522 = vmatpush1.bf16.msra.mxu0 0
    %523 = vmatprep.subr.bf16.mxu0 0
    %524 = vmatpush1.bf16.msra.mxu0 0
    %525 = vmatprep.subr.bf16.mxu0 0
    %526 = vmatpush1.bf16.msra.mxu0 0
    %527 = vmatprep.subr.bf16.mxu0 0
    %528 = vmatpush1.bf16.msra.mxu0 0
    %529 = vmatprep.subr.bf16.mxu0 0
    %530 = vmatpush1.bf16.msra.mxu0 0
    %531 = vmatprep.subr.bf16.mxu0 0
    %532 = vmatpush1.bf16.msra.mxu0 0
    %533 = vmatprep.subr.bf16.mxu0 0
    %534 = vmatpush1.bf16.msra.mxu0 0
    %535 = vmatprep.subr.bf16.mxu0 0
    %536 = vmatpush1.bf16.msra.mxu0 0
    %537 = vmatprep.subr.bf16.mxu0 0
    %538 = vmatpush1.bf16.msra.mxu0 0
    %539 = vmatprep.subr.bf16.mxu0 0
    %540 = vmatpush1.bf16.msra.mxu0 0
    %541 = vmatprep.subr.bf16.mxu0 0
    %542 = vmatpush1.bf16.msra.mxu0 0
    %543 = vmatprep.subr.bf16.mxu0 0
    %544 = vmatpush1.bf16.msra.mxu0 0
    %545 = vmatprep.mubr.bf16.mxu0 0
    %546 = vmatmul.mubr.bf16.gmra.mrb[0].mxu0 %v511
    %v547 = vpop.f32.mrb[0].mxu0
    %v548 = vadd.f32 0.0, %v547
    %v549 = vpop.f32.mrb[0].mxu0
    %v550 = vpop.f32.mrb[0].mxu0
    %v551 = vadd.f32 0.0, %v550
    %v552 = vpop.f32.mrb[0].mxu0
    %553 = vdwg.mxu0
    %555 = vrot.lane.b32.xlu0 %v318, 96
    %v556 = vpop.permute.xlu0 %555
    %558 = vrot.lane.b32.xlu0 %v320, 96
    %v559 = vpop.permute.xlu0 %558
    %v561 = vsel %vm324, %v556, 0
    %v564 = vsel %vm324, %v559, 0
    %566 = vmatprep.subr.bf16.mxu0 0
    %567 = vmatpush1.bf16.xpose.msra.mxu0 %v564
    %568 = vmatprep.subr.bf16.mxu0 0
    %569 = vmatpush1.bf16.xpose.msra.mxu0 0
    %570 = vmatprep.subr.bf16.mxu0 0
    %571 = vmatpush1.bf16.xpose.msra.mxu0 0
    %572 = vmatprep.subr.bf16.mxu0 0
    %573 = vmatpush1.bf16.xpose.msra.mxu0 0
    %574 = vmatprep.subr.bf16.mxu0 0
    %575 = vmatpush1.bf16.xpose.msra.mxu0 0
    %576 = vmatprep.subr.bf16.mxu0 0
    %577 = vmatpush1.bf16.xpose.msra.mxu0 0
    %578 = vmatprep.subr.bf16.mxu0 0
    %579 = vmatpush1.bf16.xpose.msra.mxu0 0
    %580 = vmatprep.subr.bf16.mxu0 0
    %581 = vmatpush1.bf16.xpose.msra.mxu0 0
    %582 = vmatprep.subr.bf16.mxu0 0
    %583 = vmatpush1.bf16.xpose.msra.mxu0 0
    %584 = vmatprep.subr.bf16.mxu0 0
    %585 = vmatpush1.bf16.xpose.msra.mxu0 0
    %586 = vmatprep.subr.bf16.mxu0 0
    %587 = vmatpush1.bf16.xpose.msra.mxu0 0
    %588 = vmatprep.subr.bf16.mxu0 0
    %589 = vmatpush1.bf16.xpose.msra.mxu0 0
    %590 = vmatprep.subr.bf16.mxu0 0
    %591 = vmatpush1.bf16.xpose.msra.mxu0 0
    %592 = vmatprep.subr.bf16.mxu0 0
    %593 = vmatpush1.bf16.xpose.msra.mxu0 0
    %594 = vmatprep.subr.bf16.mxu0 0
    %595 = vmatpush1.bf16.xpose.msra.mxu0 0
    %596 = vmatprep.subr.bf16.mxu0 0
    %597 = vmatpush1.bf16.xpose.msra.mxu0 0
    %598 = vmatprep.mubr.bf16.mxu0 0
    %599 = vmatmul.mubr.bf16.gmra.mrb[0].mxu0 %v561
    %v600 = vpop.f32.mrb[0].mxu0
    %v601 = vadd.f32 %v316, %v600
    %v602 = vpop.f32.mrb[0].mxu0
    %v603 = vpop.f32.mrb[0].mxu0
    %v604 = vadd.f32 %v317, %v603
    %v605 = vpop.f32.mrb[0].mxu0
    %606 = vdwg.mxu0
    %608 = vrot.lane.b32.xlu0 %v319, 96
    %v609 = vpop.permute.xlu0 %608
    %611 = vrot.lane.b32.xlu0 %v321, 96
    %v612 = vpop.permute.xlu0 %611
    %v614 = vsel %vm324, %v609, 0
    %v617 = vsel %vm324, %v612, 0
    %619 = vmatprep.subr.bf16.mxu0 0
    %620 = vmatpush1.bf16.xpose.msra.mxu0 %v617
    %621 = vmatprep.subr.bf16.mxu0 0
    %622 = vmatpush1.bf16.xpose.msra.mxu0 0
    %623 = vmatprep.subr.bf16.mxu0 0
    %624 = vmatpush1.bf16.xpose.msra.mxu0 0
    %625 = vmatprep.subr.bf16.mxu0 0
    %626 = vmatpush1.bf16.xpose.msra.mxu0 0
    %627 = vmatprep.subr.bf16.mxu0 0
    %628 = vmatpush1.bf16.xpose.msra.mxu0 0
    %629 = vmatprep.subr.bf16.mxu0 0
    %630 = vmatpush1.bf16.xpose.msra.mxu0 0
    %631 = vmatprep.subr.bf16.mxu0 0
    %632 = vmatpush1.bf16.xpose.msra.mxu0 0
    %633 = vmatprep.subr.bf16.mxu0 0
    %634 = vmatpush1.bf16.xpose.msra.mxu0 0
    %635 = vmatprep.subr.bf16.mxu0 0
    %636 = vmatpush1.bf16.xpose.msra.mxu0 0
    %637 = vmatprep.subr.bf16.mxu0 0
    %638 = vmatpush1.bf16.xpose.msra.mxu0 0
    %639 = vmatprep.subr.bf16.mxu0 0
    %640 = vmatpush1.bf16.xpose.msra.mxu0 0
    %641 = vmatprep.subr.bf16.mxu0 0
    %642 = vmatpush1.bf16.xpose.msra.mxu0 0
    %643 = vmatprep.subr.bf16.mxu0 0
    %644 = vmatpush1.bf16.xpose.msra.mxu0 0
    %645 = vmatprep.subr.bf16.mxu0 0
    %646 = vmatpush1.bf16.xpose.msra.mxu0 0
    %647 = vmatprep.subr.bf16.mxu0 0
    %648 = vmatpush1.bf16.xpose.msra.mxu0 0
    %649 = vmatprep.subr.bf16.mxu0 0
    %650 = vmatpush1.bf16.xpose.msra.mxu0 0
    %651 = vmatprep.mubr.bf16.mxu0 0
    %652 = vmatmul.mubr.bf16.gmra.mrb[0].mxu0 %v614
    %v653 = vpop.f32.mrb[0].mxu0
    %v654 = vadd.f32 %v316, %v653
    %v655 = vpop.f32.mrb[0].mxu0
    %v656 = vpop.f32.mrb[0].mxu0
    %v657 = vadd.f32 %v317, %v656
    %v658 = vpop.f32.mrb[0].mxu0
    %659 = vdwg.mxu0
    %v660 = vsel %vm419, %v601, -inf
    %661 = vmax.xlane.f32.xlu0 %v660
    %v662 = vpop.xlane.xlu0 %661
    %v663 = vsel %vm419, %v604, -inf
    %664 = vmax.xlane.f32.xlu0 %v663
    %v665 = vpop.xlane.xlu0 %664
    %v666 = vsel %vm419, %v654, -inf
    %667 = vmax.xlane.f32.xlu0 %v666
    %v668 = vpop.xlane.xlu0 %667
    %v669 = vsel %vm419, %v657, -inf
    %670 = vmax.xlane.f32.xlu0 %v669
    %v671 = vpop.xlane.xlu0 %670
    %v672 = vsub.f32 %v601, %v662
    %v673 = vsub.f32 %v604, %v665
    %v674 = vsub.f32 %v654, %v668
    %v675 = vsub.f32 %v657, %v671
    %v676 = vmul.f32 %v672, 1.442695
    %v677 = vpow.pop %v676
    %v678 = vmul.f32 %v673, 1.442695
    %v679 = vpow.pop %v678
    %v680 = vmul.f32 %v674, 1.442695
    %v681 = vpow.pop %v680
    %v682 = vmul.f32 %v675, 1.442695
    %v683 = vpow.pop %v682
    %v684 = vsel %vm419, %v677, 0.0
    %685 = vadd.xlane.f32.xlu0 %v684
    %v686 = vpop.xlane.xlu0 %685
    %v687 = vsel %vm419, %v679, 0.0
    %688 = vadd.xlane.f32.xlu0 %v687
    %v689 = vpop.xlane.xlu0 %688
    %v690 = vsel %vm419, %v681, 0.0
    %691 = vadd.xlane.f32.xlu0 %v690
    %v692 = vpop.xlane.xlu0 %691
    %v693 = vsel %vm419, %v683, 0.0
    %694 = vadd.xlane.f32.xlu0 %v693
    %v695 = vpop.xlane.xlu0 %694
    %v696 = vrcp.pop %v686
    %v697 = vrcp.pop %v689
    %v698 = vrcp.pop %v692
    %v699 = vrcp.pop %v695
    %v700 = vmul.f32 %v677, %v696
    %v701 = vmul.f32 %v679, %v697
    %v702 = vmul.f32 %v681, %v698
    %v703 = vmul.f32 %v683, %v699
    %v704 = vpack.c.bf16 %v701, %v700
    %v705 = vpack.c.bf16 %v703, %v702
    %707 = vrot.lane.b32.xlu0 %v322, 96
    %v708 = vpop.permute.xlu0 %707
    %v711 = vsel %vm419, %v704, 0
    %713 = vmatprep.subr.bf16.mxu0 0
    %714 = vmatpush1.bf16.msra.mxu0 %v708
    %715 = vmatprep.subr.bf16.mxu0 0
    %716 = vmatpush1.bf16.msra.mxu0 0
    %717 = vmatprep.subr.bf16.mxu0 0
    %718 = vmatpush1.bf16.msra.mxu0 0
    %719 = vmatprep.subr.bf16.mxu0 0
    %720 = vmatpush1.bf16.msra.mxu0 0
    %721 = vmatprep.subr.bf16.mxu0 0
    %722 = vmatpush1.bf16.msra.mxu0 0
    %723 = vmatprep.subr.bf16.mxu0 0
    %724 = vmatpush1.bf16.msra.mxu0 0
    %725 = vmatprep.subr.bf16.mxu0 0
    %726 = vmatpush1.bf16.msra.mxu0 0
    %727 = vmatprep.subr.bf16.mxu0 0
    %728 = vmatpush1.bf16.msra.mxu0 0
    %729 = vmatprep.subr.bf16.mxu0 0
    %730 = vmatpush1.bf16.msra.mxu0 0
    %731 = vmatprep.subr.bf16.mxu0 0
    %732 = vmatpush1.bf16.msra.mxu0 0
    %733 = vmatprep.subr.bf16.mxu0 0
    %734 = vmatpush1.bf16.msra.mxu0 0
    %735 = vmatprep.subr.bf16.mxu0 0
    %736 = vmatpush1.bf16.msra.mxu0 0
    %737 = vmatprep.subr.bf16.mxu0 0
    %738 = vmatpush1.bf16.msra.mxu0 0
    %739 = vmatprep.subr.bf16.mxu0 0
    %740 = vmatpush1.bf16.msra.mxu0 0
    %741 = vmatprep.subr.bf16.mxu0 0
    %742 = vmatpush1.bf16.msra.mxu0 0
    %743 = vmatprep.subr.bf16.mxu0 0
    %744 = vmatpush1.bf16.msra.mxu0 0
    %745 = vmatprep.mubr.bf16.mxu0 0
    %746 = vmatmul.mubr.bf16.gmra.mrb[0].mxu0 %v711
    %v747 = vpop.f32.mrb[0].mxu0
    %v748 = vadd.f32 0.0, %v747
    %v749 = vpop.f32.mrb[0].mxu0
    %v750 = vpop.f32.mrb[0].mxu0
    %v751 = vadd.f32 0.0, %v750
    %v752 = vpop.f32.mrb[0].mxu0
    %753 = vdwg.mxu0
    %755 = vrot.lane.b32.xlu0 %v323, 96
    %v756 = vpop.permute.xlu0 %755
    %v759 = vsel %vm419, %v705, 0
    %761 = vmatprep.subr.bf16.mxu0 0
    %762 = vmatpush1.bf16.msra.mxu0 %v756
    %763 = vmatprep.subr.bf16.mxu0 0
    %764 = vmatpush1.bf16.msra.mxu0 0
    %765 = vmatprep.subr.bf16.mxu0 0
    %766 = vmatpush1.bf16.msra.mxu0 0
    %767 = vmatprep.subr.bf16.mxu0 0
    %768 = vmatpush1.bf16.msra.mxu0 0
    %769 = vmatprep.subr.bf16.mxu0 0
    %770 = vmatpush1.bf16.msra.mxu0 0
    %771 = vmatprep.subr.bf16.mxu0 0
    %772 = vmatpush1.bf16.msra.mxu0 0
    %773 = vmatprep.subr.bf16.mxu0 0
    %774 = vmatpush1.bf16.msra.mxu0 0
    %775 = vmatprep.subr.bf16.mxu0 0
    %776 = vmatpush1.bf16.msra.mxu0 0
    %777 = vmatprep.subr.bf16.mxu0 0
    %778 = vmatpush1.bf16.msra.mxu0 0
    %779 = vmatprep.subr.bf16.mxu0 0
    %780 = vmatpush1.bf16.msra.mxu0 0
    %781 = vmatprep.subr.bf16.mxu0 0
    %782 = vmatpush1.bf16.msra.mxu0 0
    %783 = vmatprep.subr.bf16.mxu0 0
    %784 = vmatpush1.bf16.msra.mxu0 0
    %785 = vmatprep.subr.bf16.mxu0 0
    %786 = vmatpush1.bf16.msra.mxu0 0
    %787 = vmatprep.subr.bf16.mxu0 0
    %788 = vmatpush1.bf16.msra.mxu0 0
    %789 = vmatprep.subr.bf16.mxu0 0
    %790 = vmatpush1.bf16.msra.mxu0 0
    %791 = vmatprep.subr.bf16.mxu0 0
    %792 = vmatpush1.bf16.msra.mxu0 0
    %793 = vmatprep.mubr.bf16.mxu0 0
    %794 = vmatmul.mubr.bf16.gmra.mrb[0].mxu0 %v759
    %v795 = vpop.f32.mrb[0].mxu0
    %v796 = vadd.f32 0.0, %v795
    %v797 = vpop.f32.mrb[0].mxu0
    %v798 = vpop.f32.mrb[0].mxu0
    %v799 = vadd.f32 0.0, %v798
    %v800 = vpop.f32.mrb[0].mxu0
    %801 = vdwg.mxu0
    %802 = vrot.lane.b32.xlu0 %v318, 64
    %v803 = vpop.permute.xlu0 %802
    %804 = vrot.lane.b32.xlu0 %v320, 64
    %v805 = vpop.permute.xlu0 %804
    %v807 = vsel %vm324, %v803, 0
    %v810 = vsel %vm324, %v805, 0
    %812 = vmatprep.subr.bf16.mxu0 0
    %813 = vmatpush1.bf16.xpose.msra.mxu0 %v810
    %814 = vmatprep.subr.bf16.mxu0 0
    %815 = vmatpush1.bf16.xpose.msra.mxu0 0
    %816 = vmatprep.subr.bf16.mxu0 0
    %817 = vmatpush1.bf16.xpose.msra.mxu0 0
    %818 = vmatprep.subr.bf16.mxu0 0
    %819 = vmatpush1.bf16.xpose.msra.mxu0 0
    %820 = vmatprep.subr.bf16.mxu0 0
    %821 = vmatpush1.bf16.xpose.msra.mxu0 0
    %822 = vmatprep.subr.bf16.mxu0 0
    %823 = vmatpush1.bf16.xpose.msra.mxu0 0
    %824 = vmatprep.subr.bf16.mxu0 0
    %825 = vmatpush1.bf16.xpose.msra.mxu0 0
    %826 = vmatprep.subr.bf16.mxu0 0
    %827 = vmatpush1.bf16.xpose.msra.mxu0 0
    %828 = vmatprep.subr.bf16.mxu0 0
    %829 = vmatpush1.bf16.xpose.msra.mxu0 0
    %830 = vmatprep.subr.bf16.mxu0 0
    %831 = vmatpush1.bf16.xpose.msra.mxu0 0
    %832 = vmatprep.subr.bf16.mxu0 0
    %833 = vmatpush1.bf16.xpose.msra.mxu0 0
    %834 = vmatprep.subr.bf16.mxu0 0
    %835 = vmatpush1.bf16.xpose.msra.mxu0 0
    %836 = vmatprep.subr.bf16.mxu0 0
    %837 = vmatpush1.bf16.xpose.msra.mxu0 0
    %838 = vmatprep.subr.bf16.mxu0 0
    %839 = vmatpush1.bf16.xpose.msra.mxu0 0
    %840 = vmatprep.subr.bf16.mxu0 0
    %841 = vmatpush1.bf16.xpose.msra.mxu0 0
    %842 = vmatprep.subr.bf16.mxu0 0
    %843 = vmatpush1.bf16.xpose.msra.mxu0 0
    %844 = vmatprep.mubr.bf16.mxu0 0
    %845 = vmatmul.mubr.bf16.gmra.mrb[0].mxu0 %v807
    %v846 = vpop.f32.mrb[0].mxu0
    %v847 = vadd.f32 %v316, %v846
    %v848 = vpop.f32.mrb[0].mxu0
    %v849 = vpop.f32.mrb[0].mxu0
    %v850 = vadd.f32 %v317, %v849
    %v851 = vpop.f32.mrb[0].mxu0
    %852 = vdwg.mxu0
    %853 = vrot.lane.b32.xlu0 %v319, 64
    %v854 = vpop.permute.xlu0 %853
    %855 = vrot.lane.b32.xlu0 %v321, 64
    %v856 = vpop.permute.xlu0 %855
    %v858 = vsel %vm324, %v854, 0
    %v861 = vsel %vm324, %v856, 0
    %863 = vmatprep.subr.bf16.mxu0 0
    %864 = vmatpush1.bf16.xpose.msra.mxu0 %v861
    %865 = vmatprep.subr.bf16.mxu0 0
    %866 = vmatpush1.bf16.xpose.msra.mxu0 0
    %867 = vmatprep.subr.bf16.mxu0 0
    %868 = vmatpush1.bf16.xpose.msra.mxu0 0
    %869 = vmatprep.subr.bf16.mxu0 0
    %870 = vmatpush1.bf16.xpose.msra.mxu0 0
    %871 = vmatprep.subr.bf16.mxu0 0
    %872 = vmatpush1.bf16.xpose.msra.mxu0 0
    %873 = vmatprep.subr.bf16.mxu0 0
    %874 = vmatpush1.bf16.xpose.msra.mxu0 0
    %875 = vmatprep.subr.bf16.mxu0 0
    %876 = vmatpush1.bf16.xpose.msra.mxu0 0
    %877 = vmatprep.subr.bf16.mxu0 0
    %878 = vmatpush1.bf16.xpose.msra.mxu0 0
    %879 = vmatprep.subr.bf16.mxu0 0
    %880 = vmatpush1.bf16.xpose.msra.mxu0 0
    %881 = vmatprep.subr.bf16.mxu0 0
    %882 = vmatpush1.bf16.xpose.msra.mxu0 0
    %883 = vmatprep.subr.bf16.mxu0 0
    %884 = vmatpush1.bf16.xpose.msra.mxu0 0
    %885 = vmatprep.subr.bf16.mxu0 0
    %886 = vmatpush1.bf16.xpose.msra.mxu0 0
    %887 = vmatprep.subr.bf16.mxu0 0
    %888 = vmatpush1.bf16.xpose.msra.mxu0 0
    %889 = vmatprep.subr.bf16.mxu0 0
    %890 = vmatpush1.bf16.xpose.msra.mxu0 0
    %891 = vmatprep.subr.bf16.mxu0 0
    %892 = vmatpush1.bf16.xpose.msra.mxu0 0
    %893 = vmatprep.subr.bf16.mxu0 0
    %894 = vmatpush1.bf16.xpose.msra.mxu0 0
    %895 = vmatprep.mubr.bf16.mxu0 0
    %896 = vmatmul.mubr.bf16.gmra.mrb[0].mxu0 %v858
    %v897 = vpop.f32.mrb[0].mxu0
    %v898 = vadd.f32 %v316, %v897
    %v899 = vpop.f32.mrb[0].mxu0
    %v900 = vpop.f32.mrb[0].mxu0
    %v901 = vadd.f32 %v317, %v900
    %v902 = vpop.f32.mrb[0].mxu0
    %903 = vdwg.mxu0
    %v904 = vsel %vm419, %v847, -inf
    %905 = vmax.xlane.f32.xlu0 %v904
    %v906 = vpop.xlane.xlu0 %905
    %v907 = vsel %vm419, %v850, -inf
    %908 = vmax.xlane.f32.xlu0 %v907
    %v909 = vpop.xlane.xlu0 %908
    %v910 = vsel %vm419, %v898, -inf
    %911 = vmax.xlane.f32.xlu0 %v910
    %v912 = vpop.xlane.xlu0 %911
    %v913 = vsel %vm419, %v901, -inf
    %914 = vmax.xlane.f32.xlu0 %v913
    %v915 = vpop.xlane.xlu0 %914
    %v916 = vsub.f32 %v847, %v906
    %v917 = vsub.f32 %v850, %v909
    %v918 = vsub.f32 %v898, %v912
    %v919 = vsub.f32 %v901, %v915
    %v920 = vmul.f32 %v916, 1.442695
    %v921 = vpow.pop %v920
    %v922 = vmul.f32 %v917, 1.442695
    %v923 = vpow.pop %v922
    %v924 = vmul.f32 %v918, 1.442695
    %v925 = vpow.pop %v924
    %v926 = vmul.f32 %v919, 1.442695
    %v927 = vpow.pop %v926
    %v928 = vsel %vm419, %v921, 0.0
    %929 = vadd.xlane.f32.xlu0 %v928
    %v930 = vpop.xlane.xlu0 %929
    %v931 = vsel %vm419, %v923, 0.0
    %932 = vadd.xlane.f32.xlu0 %v931
    %v933 = vpop.xlane.xlu0 %932
    %v934 = vsel %vm419, %v925, 0.0
    %935 = vadd.xlane.f32.xlu0 %v934
    %v936 = vpop.xlane.xlu0 %935
    %v937 = vsel %vm419, %v927, 0.0
    %938 = vadd.xlane.f32.xlu0 %v937
    %v939 = vpop.xlane.xlu0 %938
    %v940 = vrcp.pop %v930
    %v941 = vrcp.pop %v933
    %v942 = vrcp.pop %v936
    %v943 = vrcp.pop %v939
    %v944 = vmul.f32 %v921, %v940
    %v945 = vmul.f32 %v923, %v941
    %v946 = vmul.f32 %v925, %v942
    %v947 = vmul.f32 %v927, %v943
    %v948 = vpack.c.bf16 %v945, %v944
    %v949 = vpack.c.bf16 %v947, %v946
    %950 = vrot.lane.b32.xlu0 %v322, 64
    %v951 = vpop.permute.xlu0 %950
    %v954 = vsel %vm419, %v948, 0
    %956 = vmatprep.subr.bf16.mxu0 0
    %957 = vmatpush1.bf16.msra.mxu0 %v951
    %958 = vmatprep.subr.bf16.mxu0 0
    %959 = vmatpush1.bf16.msra.mxu0 0
    %960 = vmatprep.subr.bf16.mxu0 0
    %961 = vmatpush1.bf16.msra.mxu0 0
    %962 = vmatprep.subr.bf16.mxu0 0
    %963 = vmatpush1.bf16.msra.mxu0 0
    %964 = vmatprep.subr.bf16.mxu0 0
    %965 = vmatpush1.bf16.msra.mxu0 0
    %966 = vmatprep.subr.bf16.mxu0 0
    %967 = vmatpush1.bf16.msra.mxu0 0
    %968 = vmatprep.subr.bf16.mxu0 0
    %969 = vmatpush1.bf16.msra.mxu0 0
    %970 = vmatprep.subr.bf16.mxu0 0
    %971 = vmatpush1.bf16.msra.mxu0 0
    %972 = vmatprep.subr.bf16.mxu0 0
    %973 = vmatpush1.bf16.msra.mxu0 0
    %974 = vmatprep.subr.bf16.mxu0 0
    %975 = vmatpush1.bf16.msra.mxu0 0
    %976 = vmatprep.subr.bf16.mxu0 0
    %977 = vmatpush1.bf16.msra.mxu0 0
    %978 = vmatprep.subr.bf16.mxu0 0
    %979 = vmatpush1.bf16.msra.mxu0 0
    %980 = vmatprep.subr.bf16.mxu0 0
    %981 = vmatpush1.bf16.msra.mxu0 0
    %982 = vmatprep.subr.bf16.mxu0 0
    %983 = vmatpush1.bf16.msra.mxu0 0
    %984 = vmatprep.subr.bf16.mxu0 0
    %985 = vmatpush1.bf16.msra.mxu0 0
    %986 = vmatprep.subr.bf16.mxu0 0
    %987 = vmatpush1.bf16.msra.mxu0 0
    %988 = vmatprep.mubr.bf16.mxu0 0
    %989 = vmatmul.mubr.bf16.gmra.mrb[0].mxu0 %v954
    %v990 = vpop.f32.mrb[0].mxu0
    %v991 = vadd.f32 0.0, %v990
    %v992 = vpop.f32.mrb[0].mxu0
    %v993 = vpop.f32.mrb[0].mxu0
    %v994 = vadd.f32 0.0, %v993
    %v995 = vpop.f32.mrb[0].mxu0
    %996 = vdwg.mxu0
    %997 = vrot.lane.b32.xlu0 %v323, 64
    %v998 = vpop.permute.xlu0 %997
    %v1001 = vsel %vm419, %v949, 0
    %1003 = vmatprep.subr.bf16.mxu0 0
    %1004 = vmatpush1.bf16.msra.mxu0 %v998
    %1005 = vmatprep.subr.bf16.mxu0 0
    %1006 = vmatpush1.bf16.msra.mxu0 0
    %1007 = vmatprep.subr.bf16.mxu0 0
    %1008 = vmatpush1.bf16.msra.mxu0 0
    %1009 = vmatprep.subr.bf16.mxu0 0
    %1010 = vmatpush1.bf16.msra.mxu0 0
    %1011 = vmatprep.subr.bf16.mxu0 0
    %1012 = vmatpush1.bf16.msra.mxu0 0
    %1013 = vmatprep.subr.bf16.mxu0 0
    %1014 = vmatpush1.bf16.msra.mxu0 0
    %1015 = vmatprep.subr.bf16.mxu0 0
    %1016 = vmatpush1.bf16.msra.mxu0 0
    %1017 = vmatprep.subr.bf16.mxu0 0
    %1018 = vmatpush1.bf16.msra.mxu0 0
    %1019 = vmatprep.subr.bf16.mxu0 0
    %1020 = vmatpush1.bf16.msra.mxu0 0
    %1021 = vmatprep.subr.bf16.mxu0 0
    %1022 = vmatpush1.bf16.msra.mxu0 0
    %1023 = vmatprep.subr.bf16.mxu0 0
    %1024 = vmatpush1.bf16.msra.mxu0 0
    %1025 = vmatprep.subr.bf16.mxu0 0
    %1026 = vmatpush1.bf16.msra.mxu0 0
    %1027 = vmatprep.subr.bf16.mxu0 0
    %1028 = vmatpush1.bf16.msra.mxu0 0
    %1029 = vmatprep.subr.bf16.mxu0 0
    %1030 = vmatpush1.bf16.msra.mxu0 0
    %1031 = vmatprep.subr.bf16.mxu0 0
    %1032 = vmatpush1.bf16.msra.mxu0 0
    %1033 = vmatprep.subr.bf16.mxu0 0
    %1034 = vmatpush1.bf16.msra.mxu0 0
    %1035 = vmatprep.mubr.bf16.mxu0 0
    %1036 = vmatmul.mubr.bf16.gmra.mrb[0].mxu0 %v1001
    %v1037 = vpop.f32.mrb[0].mxu0
    %v1038 = vadd.f32 0.0, %v1037
    %v1039 = vpop.f32.mrb[0].mxu0
    %v1040 = vpop.f32.mrb[0].mxu0
    %v1041 = vadd.f32 0.0, %v1040
    %v1042 = vpop.f32.mrb[0].mxu0
    %1043 = vdwg.mxu0
    %1044 = vrot.lane.b32.xlu0 %v318, 32
    %v1045 = vpop.permute.xlu0 %1044
    %1046 = vrot.lane.b32.xlu0 %v320, 32
    %v1047 = vpop.permute.xlu0 %1046
    %v1049 = vsel %vm324, %v1045, 0
    %v1052 = vsel %vm324, %v1047, 0
    %1054 = vmatprep.subr.bf16.mxu0 0
    %1055 = vmatpush1.bf16.xpose.msra.mxu0 %v1052
    %1056 = vmatprep.subr.bf16.mxu0 0
    %1057 = vmatpush1.bf16.xpose.msra.mxu0 0
    %1058 = vmatprep.subr.bf16.mxu0 0
    %1059 = vmatpush1.bf16.xpose.msra.mxu0 0
    %1060 = vmatprep.subr.bf16.mxu0 0
    %1061 = vmatpush1.bf16.xpose.msra.mxu0 0
    %1062 = vmatprep.subr.bf16.mxu0 0
    %1063 = vmatpush1.bf16.xpose.msra.mxu0 0
    %1064 = vmatprep.subr.bf16.mxu0 0
    %1065 = vmatpush1.bf16.xpose.msra.mxu0 0
    %1066 = vmatprep.subr.bf16.mxu0 0
    %1067 = vmatpush1.bf16.xpose.msra.mxu0 0
    %1068 = vmatprep.subr.bf16.mxu0 0
    %1069 = vmatpush1.bf16.xpose.msra.mxu0 0
    %1070 = vmatprep.subr.bf16.mxu0 0
    %1071 = vmatpush1.bf16.xpose.msra.mxu0 0
    %1072 = vmatprep.subr.bf16.mxu0 0
    %1073 = vmatpush1.bf16.xpose.msra.mxu0 0
    %1074 = vmatprep.subr.bf16.mxu0 0
    %1075 = vmatpush1.bf16.xpose.msra.mxu0 0
    %1076 = vmatprep.subr.bf16.mxu0 0
    %1077 = vmatpush1.bf16.xpose.msra.mxu0 0
    %1078 = vmatprep.subr.bf16.mxu0 0
    %1079 = vmatpush1.bf16.xpose.msra.mxu0 0
    %1080 = vmatprep.subr.bf16.mxu0 0
    %1081 = vmatpush1.bf16.xpose.msra.mxu0 0
    %1082 = vmatprep.subr.bf16.mxu0 0
    %1083 = vmatpush1.bf16.xpose.msra.mxu0 0
    %1084 = vmatprep.subr.bf16.mxu0 0
    %1085 = vmatpush1.bf16.xpose.msra.mxu0 0
    %1086 = vmatprep.mubr.bf16.mxu0 0
    %1087 = vmatmul.mubr.bf16.gmra.mrb[0].mxu0 %v1049
    %v1088 = vpop.f32.mrb[0].mxu0
    %v1089 = vadd.f32 %v316, %v1088
    %v1090 = vpop.f32.mrb[0].mxu0
    %v1091 = vpop.f32.mrb[0].mxu0
    %v1092 = vadd.f32 %v317, %v1091
    %v1093 = vpop.f32.mrb[0].mxu0
    %1094 = vdwg.mxu0
    %1095 = vrot.lane.b32.xlu0 %v319, 32
    %v1096 = vpop.permute.xlu0 %1095
    %1097 = vrot.lane.b32.xlu0 %v321, 32
    %v1098 = vpop.permute.xlu0 %1097
    %v1100 = vsel %vm324, %v1096, 0
    %v1103 = vsel %vm324, %v1098, 0
    %1105 = vmatprep.subr.bf16.mxu0 0
    %1106 = vmatpush1.bf16.xpose.msra.mxu0 %v1103
    %1107 = vmatprep.subr.bf16.mxu0 0
    %1108 = vmatpush1.bf16.xpose.msra.mxu0 0
    %1109 = vmatprep.subr.bf16.mxu0 0
    %1110 = vmatpush1.bf16.xpose.msra.mxu0 0
    %1111 = vmatprep.subr.bf16.mxu0 0
    %1112 = vmatpush1.bf16.xpose.msra.mxu0 0
    %1113 = vmatprep.subr.bf16.mxu0 0
    %1114 = vmatpush1.bf16.xpose.msra.mxu0 0
    %1115 = vmatprep.subr.bf16.mxu0 0
    %1116 = vmatpush1.bf16.xpose.msra.mxu0 0
    %1117 = vmatprep.subr.bf16.mxu0 0
    %1118 = vmatpush1.bf16.xpose.msra.mxu0 0
    %1119 = vmatprep.subr.bf16.mxu0 0
    %1120 = vmatpush1.bf16.xpose.msra.mxu0 0
    %1121 = vmatprep.subr.bf16.mxu0 0
    %1122 = vmatpush1.bf16.xpose.msra.mxu0 0
    %1123 = vmatprep.subr.bf16.mxu0 0
    %1124 = vmatpush1.bf16.xpose.msra.mxu0 0
    %1125 = vmatprep.subr.bf16.mxu0 0
    %1126 = vmatpush1.bf16.xpose.msra.mxu0 0
    %1127 = vmatprep.subr.bf16.mxu0 0
    %1128 = vmatpush1.bf16.xpose.msra.mxu0 0
    %1129 = vmatprep.subr.bf16.mxu0 0
    %1130 = vmatpush1.bf16.xpose.msra.mxu0 0
    %1131 = vmatprep.subr.bf16.mxu0 0
    %1132 = vmatpush1.bf16.xpose.msra.mxu0 0
    %1133 = vmatprep.subr.bf16.mxu0 0
    %1134 = vmatpush1.bf16.xpose.msra.mxu0 0
    %1135 = vmatprep.subr.bf16.mxu0 0
    %1136 = vmatpush1.bf16.xpose.msra.mxu0 0
    %1137 = vmatprep.mubr.bf16.mxu0 0
    %1138 = vmatmul.mubr.bf16.gmra.mrb[0].mxu0 %v1100
    %v1139 = vpop.f32.mrb[0].mxu0
    %v1140 = vadd.f32 %v316, %v1139
    %v1141 = vpop.f32.mrb[0].mxu0
    %v1142 = vpop.f32.mrb[0].mxu0
    %v1143 = vadd.f32 %v317, %v1142
    %v1144 = vpop.f32.mrb[0].mxu0
    %1145 = vdwg.mxu0
    %v1146 = vsel %vm419, %v1089, -inf
    %1147 = vmax.xlane.f32.xlu0 %v1146
    %v1148 = vpop.xlane.xlu0 %1147
    %v1149 = vsel %vm419, %v1092, -inf
    %1150 = vmax.xlane.f32.xlu0 %v1149
    %v1151 = vpop.xlane.xlu0 %1150
    %v1152 = vsel %vm419, %v1140, -inf
    %1153 = vmax.xlane.f32.xlu0 %v1152
    %v1154 = vpop.xlane.xlu0 %1153
    %v1155 = vsel %vm419, %v1143, -inf
    %1156 = vmax.xlane.f32.xlu0 %v1155
    %v1157 = vpop.xlane.xlu0 %1156
    %v1158 = vsub.f32 %v1089, %v1148
    %v1159 = vsub.f32 %v1092, %v1151
    %v1160 = vsub.f32 %v1140, %v1154
    %v1161 = vsub.f32 %v1143, %v1157
    %v1162 = vmul.f32 %v1158, 1.442695
    %v1163 = vpow.pop %v1162
    %v1164 = vmul.f32 %v1159, 1.442695
    %v1165 = vpow.pop %v1164
    %v1166 = vmul.f32 %v1160, 1.442695
    %v1167 = vpow.pop %v1166
    %v1168 = vmul.f32 %v1161, 1.442695
    %v1169 = vpow.pop %v1168
    %v1170 = vsel %vm419, %v1163, 0.0
    %1171 = vadd.xlane.f32.xlu0 %v1170
    %v1172 = vpop.xlane.xlu0 %1171
    %v1173 = vsel %vm419, %v1165, 0.0
    %1174 = vadd.xlane.f32.xlu0 %v1173
    %v1175 = vpop.xlane.xlu0 %1174
    %v1176 = vsel %vm419, %v1167, 0.0
    %1177 = vadd.xlane.f32.xlu0 %v1176
    %v1178 = vpop.xlane.xlu0 %1177
    %v1179 = vsel %vm419, %v1169, 0.0
    %1180 = vadd.xlane.f32.xlu0 %v1179
    %v1181 = vpop.xlane.xlu0 %1180
    %v1182 = vrcp.pop %v1172
    %v1183 = vrcp.pop %v1175
    %v1184 = vrcp.pop %v1178
    %v1185 = vrcp.pop %v1181
    %v1186 = vmul.f32 %v1163, %v1182
    %v1187 = vmul.f32 %v1165, %v1183
    %v1188 = vmul.f32 %v1167, %v1184
    %v1189 = vmul.f32 %v1169, %v1185
    %v1190 = vpack.c.bf16 %v1187, %v1186
    %v1191 = vpack.c.bf16 %v1189, %v1188
    %1192 = vrot.lane.b32.xlu0 %v322, 32
    %v1193 = vpop.permute.xlu0 %1192
    %v1196 = vsel %vm419, %v1190, 0
    %1198 = vmatprep.subr.bf16.mxu0 0
    %1199 = vmatpush1.bf16.msra.mxu0 %v1193
    %1200 = vmatprep.subr.bf16.mxu0 0
    %1201 = vmatpush1.bf16.msra.mxu0 0
    %1202 = vmatprep.subr.bf16.mxu0 0
    %1203 = vmatpush1.bf16.msra.mxu0 0
    %1204 = vmatprep.subr.bf16.mxu0 0
    %1205 = vmatpush1.bf16.msra.mxu0 0
    %1206 = vmatprep.subr.bf16.mxu0 0
    %1207 = vmatpush1.bf16.msra.mxu0 0
    %1208 = vmatprep.subr.bf16.mxu0 0
    %1209 = vmatpush1.bf16.msra.mxu0 0
    %1210 = vmatprep.subr.bf16.mxu0 0
    %1211 = vmatpush1.bf16.msra.mxu0 0
    %1212 = vmatprep.subr.bf16.mxu0 0
    %1213 = vmatpush1.bf16.msra.mxu0 0
    %1214 = vmatprep.subr.bf16.mxu0 0
    %1215 = vmatpush1.bf16.msra.mxu0 0
    %1216 = vmatprep.subr.bf16.mxu0 0
    %1217 = vmatpush1.bf16.msra.mxu0 0
    %1218 = vmatprep.subr.bf16.mxu0 0
    %1219 = vmatpush1.bf16.msra.mxu0 0
    %1220 = vmatprep.subr.bf16.mxu0 0
    %1221 = vmatpush1.bf16.msra.mxu0 0
    %1222 = vmatprep.subr.bf16.mxu0 0
    %1223 = vmatpush1.bf16.msra.mxu0 0
    %1224 = vmatprep.subr.bf16.mxu0 0
    %1225 = vmatpush1.bf16.msra.mxu0 0
    %1226 = vmatprep.subr.bf16.mxu0 0
    %1227 = vmatpush1.bf16.msra.mxu0 0
    %1228 = vmatprep.subr.bf16.mxu0 0
    %1229 = vmatpush1.bf16.msra.mxu0 0
    %1230 = vmatprep.mubr.bf16.mxu0 0
    %1231 = vmatmul.mubr.bf16.gmra.mrb[0].mxu0 %v1196
    %v1232 = vpop.f32.mrb[0].mxu0
    %v1233 = vadd.f32 0.0, %v1232
    %v1234 = vpop.f32.mrb[0].mxu0
    %v1235 = vpop.f32.mrb[0].mxu0
    %v1236 = vadd.f32 0.0, %v1235
    %v1237 = vpop.f32.mrb[0].mxu0
    %1238 = vdwg.mxu0
    %1239 = vrot.lane.b32.xlu0 %v323, 32
    %v1240 = vpop.permute.xlu0 %1239
    %v1243 = vsel %vm419, %v1191, 0
    %1245 = vmatprep.subr.bf16.mxu0 0
    %1246 = vmatpush1.bf16.msra.mxu0 %v1240
    %1247 = vmatprep.subr.bf16.mxu0 0
    %1248 = vmatpush1.bf16.msra.mxu0 0
    %1249 = vmatprep.subr.bf16.mxu0 0
    %1250 = vmatpush1.bf16.msra.mxu0 0
    %1251 = vmatprep.subr.bf16.mxu0 0
    %1252 = vmatpush1.bf16.msra.mxu0 0
    %1253 = vmatprep.subr.bf16.mxu0 0
    %1254 = vmatpush1.bf16.msra.mxu0 0
    %1255 = vmatprep.subr.bf16.mxu0 0
    %1256 = vmatpush1.bf16.msra.mxu0 0
    %1257 = vmatprep.subr.bf16.mxu0 0
    %1258 = vmatpush1.bf16.msra.mxu0 0
    %1259 = vmatprep.subr.bf16.mxu0 0
    %1260 = vmatpush1.bf16.msra.mxu0 0
    %1261 = vmatprep.subr.bf16.mxu0 0
    %1262 = vmatpush1.bf16.msra.mxu0 0
    %1263 = vmatprep.subr.bf16.mxu0 0
    %1264 = vmatpush1.bf16.msra.mxu0 0
    %1265 = vmatprep.subr.bf16.mxu0 0
    %1266 = vmatpush1.bf16.msra.mxu0 0
    %1267 = vmatprep.subr.bf16.mxu0 0
    %1268 = vmatpush1.bf16.msra.mxu0 0
    %1269 = vmatprep.subr.bf16.mxu0 0
    %1270 = vmatpush1.bf16.msra.mxu0 0
    %1271 = vmatprep.subr.bf16.mxu0 0
    %1272 = vmatpush1.bf16.msra.mxu0 0
    %1273 = vmatprep.subr.bf16.mxu0 0
    %1274 = vmatpush1.bf16.msra.mxu0 0
    %1275 = vmatprep.subr.bf16.mxu0 0
    %1276 = vmatpush1.bf16.msra.mxu0 0
    %1277 = vmatprep.mubr.bf16.mxu0 0
    %1278 = vmatmul.mubr.bf16.gmra.mrb[0].mxu0 %v1243
    %v1279 = vpop.f32.mrb[0].mxu0
    %v1280 = vadd.f32 0.0, %v1279
    %v1281 = vpop.f32.mrb[0].mxu0
    %v1282 = vpop.f32.mrb[0].mxu0
    %v1283 = vadd.f32 0.0, %v1282
    %v1284 = vpop.f32.mrb[0].mxu0
    %1285 = vdwg.mxu0
    %1290 = vrot.lane.b32.xlu0 %v748, 32
    %v1291 = vpop.permute.xlu0 %1290
    %1292 = vrot.lane.b32.xlu0 %v751, 32
    %v1293 = vpop.permute.xlu0 %1292
    %1294 = vrot.lane.b32.xlu0 %v796, 32
    %v1295 = vpop.permute.xlu0 %1294
    %1296 = vrot.lane.b32.xlu0 %v799, 32
    %v1297 = vpop.permute.xlu0 %1296
    %1306 = vrot.lane.b32.xlu0 %v991, 64
    %v1307 = vpop.permute.xlu0 %1306
    %1308 = vrot.lane.b32.xlu0 %v994, 64
    %v1309 = vpop.permute.xlu0 %1308
    %1310 = vrot.lane.b32.xlu0 %v1038, 64
    %v1311 = vpop.permute.xlu0 %1310
    %1312 = vrot.lane.b32.xlu0 %v1041, 64
    %v1313 = vpop.permute.xlu0 %1312
    %1322 = vrot.lane.b32.xlu0 %v1233, 96
    %v1323 = vpop.permute.xlu0 %1322
    %1324 = vrot.lane.b32.xlu0 %v1236, 96
    %v1325 = vpop.permute.xlu0 %1324
    %1326 = vrot.lane.b32.xlu0 %v1280, 96
    %v1327 = vpop.permute.xlu0 %1326
    %1328 = vrot.lane.b32.xlu0 %v1283, 96
    %v1329 = vpop.permute.xlu0 %1328
    %v1334 = vsel %vm324, %v504, %v1291
    %v1335 = vsel %vm324, %v507, %v1293
    %v1336 = vsel %vm324, %v548, %v1295
    %v1337 = vsel %vm324, %v551, %v1297
    %vm1338 = vcmask 523264
    %v1339 = vsel %vm1338, %v1334, %v1307
    %v1340 = vsel %vm1338, %v1335, %v1309
    %v1341 = vsel %vm1338, %v1336, %v1311
    %v1342 = vsel %vm1338, %v1337, %v1313
    %vm1343 = vcmask 785408
    %v1344 = vsel %vm1343, %v1339, %v1323
    %v1345 = vsel %vm1343, %v1340, %v1325
    %v1346 = vsel %vm1343, %v1341, %v1327
    %v1347 = vsel %vm1343, %v1342, %v1329
    %1348 = vst [vmem:[#allocation7] sm:$0xff] %v1344
    %1349 = vst [vmem:[#allocation7 + $0x8] sm:$0xff] %v1345
    %1350 = vst [vmem:[#allocation7 + $0x10] sm:$0xff] %v1346
    %1351 = vst [vmem:[#allocation7 + $0x18] sm:$0xff] %v1347
    // Predicated region
    $region18: #{tpu_custom_call.1} parent=1 // pred_check
      _
    $region19: #{tpu_custom_call.1} parent=1 // pred_check_branch
      %1353 = sbr.rel (0) target = $region21
    $region20: #{tpu_custom_call.1} parent=1 // pred_region
      %s1355 = ssub.s32 512, 512
      %1356 = vsyncadd [#allocation4], %s1355
      %s1357 = sshll.u32 [#allocation7], 4
      %s1358 = int_to_ptr.vmem [resolvable:$true] %s1357
      %1363 = dma.vmem_to_hbm [thread:$0]  %s1358, 512, %s2, [#allocation4], 128, 128, 8
    $region21: #{tpu_custom_call.1} parent=1 // pred_fallthru
      _
    // Predicated region
    $region22: #{tpu_custom_call.1} parent=1 // pred_check
      _
    $region23: #{tpu_custom_call.1} parent=1 // pred_check_branch
      %1365 = sbr.rel (0) target = $region25
    $region24: #{tpu_custom_call.1} parent=1 // pred_region
      %1366 = dma.done [#allocation4], 512
    $region25: #{tpu_custom_call.1} parent=1 // pred_fallthru
      _
    %1367 = vsyncpa [#allocation3], 1
    %1368 = vsyncpa [#allocation6], 1
    %1369 = vsyncpa [#allocation4], 1

</llo_original>
